<compile_context>
chip_gen: v5e
topology: v5e:2x2
jax: 0.10.0
libtpu: 0.0.40
codegen_flags: <defaults>
</compile_context>

<pallas_src>
import jax
import jax.numpy as jnp
from jax.experimental import pallas as pl
from jax.experimental.pallas import tpu as pltpu


# ----------------------------------------------------------------------------
# Fused Pallas kernel: conv2 + (class-batched) cls chain, BN scales pre-folded
# ----------------------------------------------------------------------------
def fused_kernel(xl_ref, up_ref, w2_ref, b2_ref,
                 wsk_ref, ba_ref, wb_ref, bb_ref, o_ref):
    # xl_ref : [tm, 256]  bf16      up_ref : [tm, P*H] bf16 (already * wa_up*sa)
    # w2_ref : [256, 48]  bf16 (s2 folded)     b2  : [1, 48]   f32
    # wsk_ref: [48, P*H]  bf16 (sa folded)     ba  : [1, P*H]  f32
    # wb_ref : [P*H,Npad] bf16 (sb folded, block-diag)  bb : [1, Npad] f32
    # o_ref  : [tm, Npad] bf16
    # skip = ReLU(conv2(xl) + b2) -- lives only in VMEM, never hits HBM.
    skip = jnp.dot(xl_ref[...], w2_ref[...], preferred_element_type=jnp.float32)
    skip = jnp.maximum(skip + b2_ref[...], 0.0)                        # [tm, 48] f32

    # First chain conv, all classes at once: up-branch arrives pre-multiplied.
    h = jnp.dot(skip.astype(wsk_ref.dtype), wsk_ref[...],
                preferred_element_type=jnp.float32)                    # [tm, P*H]
    h = h + up_ref[...].astype(jnp.float32)
    h = jnp.maximum(h + ba_ref[...], 0.0)

    # Second chain conv as one block-diagonal matmul, lane-dense (Npad) output.
    y = jnp.dot(h.astype(wb_ref.dtype), wb_ref[...],
                preferred_element_type=jnp.float32)                    # [tm, Npad]
    y = jnp.maximum(y + bb_ref[...], 0.0)
    o_ref[...] = y.astype(o_ref.dtype)                                 # bf16 store


def fused_final_cls_pallas(xl_flat, q_up, w2, b2, w_skip, ba, wb_bd, bb, *,
                           tm_cap=1024, vmem_limit_bytes=32 * 1024 * 1024):
    M, Cin = xl_flat.shape
    PH = q_up.shape[1]
    C2 = w2.shape[1]
    Npad = wb_bd.shape[1]

    # Grid sizing: at least 2 programs (and even when possible) so v7x's two
    # TensorCores get a balanced split via dimension_semantics=("parallel",);
    # tiles are multiples of 16 rows (bf16 vreg = [16,128]); tm_cap keeps the
    # footprint small enough for v7x's 64 MiB VMEM (and there is no roofline
    # gain beyond ~1-2K rows anyway).
    grid_m = max(2, pl.cdiv(M, tm_cap))
    if grid_m % 2:
        grid_m += 1
    tm = max(16, ((pl.cdiv(M, grid_m) + 15) // 16) * 16)
    grid_m = pl.cdiv(M, tm)
    Mp = grid_m * tm
    if Mp != M:                      # ragged M: zero-pad, slice garbage off after
        pad = ((0, Mp - M), (0, 0))
        xl_flat = jnp.pad(xl_flat, pad)
        q_up = jnp.pad(q_up, pad)

    row = lambda m: (m, 0)           # spatial-tiled operands
    rep = lambda m: (0, 0)           # weights / biases (same block every step)

    out = pl.pallas_call(
        fused_kernel,
        out_shape=jax.ShapeDtypeStruct((Mp, Npad), jnp.bfloat16),
        grid_spec=pltpu.PrefetchScalarGridSpec(
            num_scalar_prefetch=0,
            grid=(grid_m,),
            in_specs=[
                pl.BlockSpec((tm, Cin), row),
                pl.BlockSpec((tm, PH), row),
                pl.BlockSpec((Cin, C2), rep),
                pl.BlockSpec((1, C2), rep),
                pl.BlockSpec((C2, PH), rep),
                pl.BlockSpec((1, PH), rep),
                pl.BlockSpec((PH, Npad), rep),
                pl.BlockSpec((1, Npad), rep),
            ],
            out_specs=pl.BlockSpec((tm, Npad), row),
        ),
        compiler_params=pltpu.CompilerParams(
            dimension_semantics=("parallel",),      # shard grid over v7x's 2 TCs
            vmem_limit_bytes=vmem_limit_bytes,      # portable v5e/v6e/v7x budget
        ),
    )(xl_flat, q_up, w2, b2, w_skip, ba, wb_bd, bb)
    return out[:M] if Mp != M else out


# ----------------------------------------------------------------------------
# Plain-JAX glue (interp matrices, BN folding, weight repacking)
# ----------------------------------------------------------------------------
def _interp_matrix(out_size, in_size, dtype=jnp.float32):
    """Row-stochastic matrix for 1D linear interpolation, align_corners=True."""
    if out_size == 1:
        src = jnp.zeros((1,), jnp.float32)
    else:
        src = jnp.arange(out_size, dtype=jnp.float32) * (in_size - 1) / (out_size - 1)
    lo = jnp.clip(jnp.floor(src).astype(jnp.int32), 0, max(in_size - 2, 0))
    hi = jnp.minimum(lo + 1, in_size - 1)   # explicit clamp (in_size==1 edge case)
    frac = src - lo.astype(jnp.float32)
    R = (jax.nn.one_hot(lo, in_size, dtype=jnp.float32) * (1.0 - frac)[:, None]
         + jax.nn.one_hot(hi, in_size, dtype=jnp.float32) * frac[:, None])
    return R.astype(dtype)


def bilinear_align_corners(x_nchw, th, tw):
    """[N,C,h,w] -> [N,C,th,tw]; matches F.interpolate(..., align_corners=True)."""
    _, _, h, w = x_nchw.shape
    Ry = _interp_matrix(th, h, x_nchw.dtype)
    Rx = _interp_matrix(tw, w, x_nchw.dtype)
    return jnp.einsum('iy,jx,ncyx->ncij', Ry, Rx, x_nchw)


def fold_bn(gamma, beta, mean, var, eps=1e-5):
    s = gamma / jnp.sqrt(var + eps)
    b = beta - mean * s
    return s, b


def final_cls_forward(params, p_node_list, xl):
    """p_node_list: list of [N, hidden, ph, pw]; xl: [N, 256, th, tw] (NCHW)."""
    N, Cin, th, tw = xl.shape
    cls_p = len(p_node_list)
    H = p_node_list[0].shape[1]
    M = N * th * tw
    PH = cls_p * H
    Npad = ((PH + 127) // 128) * 128
    bf16 = jnp.bfloat16

    # --- folded BatchNorm affines ---
    s2, b2 = fold_bn(*params['bn2'])                  # [48]
    sa, ba = fold_bn(*params['bna'])                  # [P, H]
    sb, bb = fold_bn(*params['bnb'])                  # [P, H]

    # --- repack weights: BN scales folded into weights, class dim folded into
    #     the matmul N dimension ---
    w2_s = params['w2'] * s2[None, :]                  # [256, 48]
    wa = params['wa']                                  # [P, H+48, H], cat order [up, skip]
    wa_up_s = wa[:, :H, :] * sa[:, None, :]            # [P, H, H]
    wa_skip_s = wa[:, H:, :] * sa[:, None, :]          # [P, 48, H]
    w_skip_all = jnp.transpose(wa_skip_s, (1, 0, 2)).reshape(-1, PH)   # [48, P*H]
    wb_s = params['wb'] * sb[:, None, :]               # [P, H, H]

    wb_bd = jnp.zeros((PH, Npad), jnp.float32)         # block-diagonal, lane-padded
    for i in range(cls_p):
        wb_bd = wb_bd.at[i * H:(i + 1) * H, i * H:(i + 1) * H].set(wb_s[i])

    b2_all = b2.reshape(1, -1)
    ba_all = ba.reshape(1, PH)
    bb_all = jnp.pad(bb.reshape(-1), (0, Npad - PH)).reshape(1, Npad)

    # --- xl: cast to bf16 first, then NCHW -> [M, 256] (no f32 [M,256] pass) ---
    xl_flat = jnp.transpose(xl.astype(bf16), (0, 2, 3, 1)).reshape(M, Cin)

    # --- up branch: apply (scale-folded) wa_up at LOW resolution (linearity of
    #     bilinear interp, align_corners), then interpolate the H-channel
    #     result.  The interp einsum runs on bf16 operands so the [M, PH]
    #     result is produced directly in bf16 (no f32 intermediate). ---
    p_all = jnp.stack(p_node_list, axis=0)             # [P, N, H, ph, pw]
    ph, pw = p_all.shape[-2:]
    p_nhwc = jnp.transpose(p_all, (0, 1, 3, 4, 2))     # [P, N, ph, pw, H]
    q_low = jnp.einsum('pnyxh,phk->nyxpk', p_nhwc, wa_up_s).reshape(N, ph, pw, PH)
    Ry = _interp_matrix(th, ph, bf16)
    Rx = _interp_matrix(tw, pw, bf16)
    q_up = jnp.einsum('iy,jx,nyxc->nijc', Ry, Rx,
                      q_low.astype(bf16)).reshape(M, PH).astype(bf16)

    # --- single fused Pallas call (bf16 output) ---
    out = fused_final_cls_pallas(
        xl_flat, q_up,
        w2_s.astype(bf16), b2_all,
        w_skip_all.astype(bf16), ba_all,
        wb_bd.astype(bf16), bb_all)                     # [M, Npad] bf16

    # Slice / reshape / transpose in bf16, cast to f32 last (module interface).
    out = out[:, :PH].reshape(N, th, tw, cls_p, H)
    out = jnp.transpose(out, (3, 0, 4, 1, 2)).astype(jnp.float32)   # [P,N,H,th,tw]
    return [out[i] for i in range(cls_p)]


# Pure-JAX f32 reference (no Pallas) for correctness checking.
def final_cls_reference(params, p_node_list, xl):
    N, _, th, tw = xl.shape
    cls_p = len(p_node_list)
    xl_nhwc = jnp.transpose(xl, (0, 2, 3, 1))
    s2, b2 = fold_bn(*params['bn2'])
    skip = jnp.maximum(xl_nhwc @ params['w2'] * s2 + b2, 0.0)
    sa, ba = fold_bn(*params['bna'])
    sb, bb = fold_bn(*params['bnb'])
    outs = []
    for i in range(cls_p):
        up = bilinear_align_corners(p_node_list[i], th, tw)
        up = jnp.transpose(up, (0, 2, 3, 1))
        cat = jnp.concatenate([up, skip], axis=-1)
        h = jnp.maximum(cat @ params['wa'][i] * sa[i] + ba[i], 0.0)
        y = jnp.maximum(h @ params['wb'][i] * sb[i] + bb[i], 0.0)
        outs.append(jnp.transpose(y, (0, 3, 1, 2)))
    return outs


# ----------------------------------------------------------------------------
# Deterministic parameter construction (synthetic, matching __init__ shapes)
# ----------------------------------------------------------------------------
def make_params(key, hidden_dim, cls_p):
    ks = jax.random.split(key, 6)
    cin_a = 48 + hidden_dim

    def bn_params(k, c, lead=()):
        k1, k2, k3, k4 = jax.random.split(k, 4)
        shape = lead + (c,)
        gamma = 1.0 + 0.1 * jax.random.normal(k1, shape, jnp.float32)
        beta = 0.05 * jax.random.normal(k2, shape, jnp.float32)
        mean = 0.1 * jax.random.normal(k3, shape, jnp.float32)
        var = 0.5 + jax.random.uniform(k4, shape, jnp.float32)
        return (gamma, beta, mean, var)

    params = {
        # conv2: Conv2d(256, 48, 1) -> matmul weight [256, 48]
        'w2': 0.05 * jax.random.normal(ks[0], (256, 48), jnp.float32),
        'bn2': bn_params(ks[1], 48),
        # conv3[i]: Conv2d(48+hidden -> hidden, 1) then Conv2d(hidden -> hidden, 1)
        'wa': 0.05 * jax.random.normal(ks[2], (cls_p, cin_a, hidden_dim), jnp.float32),
        'bna': bn_params(ks[3], hidden_dim, (cls_p,)),
        'wb': 0.05 * jax.random.normal(ks[4], (cls_p, hidden_dim, hidden_dim), jnp.float32),
        'bnb': bn_params(ks[5], hidden_dim, (cls_p,)),
    }
    return params


# ----------------------------------------------------------------------------
if __name__ == "__main__":
    key = jax.random.PRNGKey(0)
    N, th, tw = 2, 16, 16          # xl spatial
    ph, pw = 8, 8                  # low-res node spatial
    hidden_dim, cls_p = 32, 3

    kp, kx, *kn = jax.random.split(key, 2 + cls_p)
    params = make_params(kp, hidden_dim, cls_p)
    xl = jax.random.normal(kx, (N, 256, th, tw), jnp.float32)
    p_node_list = [jax.random.normal(kn[i], (N, hidden_dim, ph, pw), jnp.float32)
                   for i in range(cls_p)]

    fwd = jax.jit(final_cls_forward)
    outs = fwd(params, p_node_list, xl)
    outs = [jax.block_until_ready(o) for o in outs]

    refs = final_cls_reference(params, p_node_list, xl)
    for o, r in zip(outs, refs):
        assert o.shape == (N, hidden_dim, th, tw)
        # bf16 matmul operands / interp / output (f32 MXU accumulation) vs
        # pure-f32 reference.
        assert jnp.allclose(o, r, rtol=2e-2, atol=3e-2), \
            float(jnp.max(jnp.abs(o - r)))

    print("KERNEL_OK")
</pallas_src>

<mosaic_0001>
module attributes {stable_mosaic.version = 11 : i64} {
  func.func @fused_kernel(%arg0: i32, %arg1: memref<256x256xbf16, #tpu.memory_space<vmem>>, %arg2: memref<256x96xbf16, #tpu.memory_space<vmem>>, %arg3: memref<256x48xbf16, #tpu.memory_space<vmem>>, %arg4: memref<1x48xf32, #tpu.memory_space<vmem>>, %arg5: memref<48x96xbf16, #tpu.memory_space<vmem>>, %arg6: memref<1x96xf32, #tpu.memory_space<vmem>>, %arg7: memref<96x128xbf16, #tpu.memory_space<vmem>>, %arg8: memref<1x128xf32, #tpu.memory_space<vmem>>, %arg9: memref<256x128xbf16, #tpu.memory_space<vmem>>) attributes {dimension_semantics = [#tpu.dimension_semantics<parallel>], iteration_bounds = array<i64: 2>, scalar_prefetch = 0 : i64, scratch_operands = 0 : i64, tpu.core_type = #tpu.core_type<tc>, window_params = [{transform_indices = @transform_0, window_bounds = array<i64: 256, 256>}, {transform_indices = @transform_1, window_bounds = array<i64: 256, 96>}, {pipeline_mode = #tpu.pipeline_mode<synchronous>, transform_indices = @transform_2, window_bounds = array<i64: 256, 48>}, {pipeline_mode = #tpu.pipeline_mode<synchronous>, transform_indices = @transform_3, window_bounds = array<i64: 1, 48>}, {pipeline_mode = #tpu.pipeline_mode<synchronous>, transform_indices = @transform_4, window_bounds = array<i64: 48, 96>}, {pipeline_mode = #tpu.pipeline_mode<synchronous>, transform_indices = @transform_5, window_bounds = array<i64: 1, 96>}, {pipeline_mode = #tpu.pipeline_mode<synchronous>, transform_indices = @transform_6, window_bounds = array<i64: 96, 128>}, {pipeline_mode = #tpu.pipeline_mode<synchronous>, transform_indices = @transform_7, window_bounds = array<i64: 1, 128>}, {transform_indices = @transform_8, window_bounds = array<i64: 256, 128>}]} {
    %c0 = arith.constant 0 : index
    %c0_0 = arith.constant 0 : index
    %0 = vector.load %arg1[%c0, %c0_0] : memref<256x256xbf16, #tpu.memory_space<vmem>>, vector<256x256xbf16>
    %c0_1 = arith.constant 0 : index
    %c0_2 = arith.constant 0 : index
    %1 = vector.load %arg3[%c0_1, %c0_2] : memref<256x48xbf16, #tpu.memory_space<vmem>>, vector<256x48xbf16>
    %cst = arith.constant dense<0.000000e+00> : vector<256x48xf32>
    %2 = tpu.matmul %0, %1, %cst {dimension_numbers = #tpu.dot_dimension_numbers<[1], [0], [0], [1], [0, 0, 1, 1], [], []>} : vector<256x256xbf16>, vector<256x48xbf16>, vector<256x48xf32> -> vector<256x48xf32>
    %c0_3 = arith.constant 0 : index
    %c0_4 = arith.constant 0 : index
    %3 = vector.load %arg4[%c0_3, %c0_4] : memref<1x48xf32, #tpu.memory_space<vmem>>, vector<1x48xf32>
    %4 = vector.broadcast %3 : vector<1x48xf32> to vector<256x48xf32>
    %5 = arith.addf %2, %4 : vector<256x48xf32>
    %cst_5 = arith.constant 0.000000e+00 : f32
    %6 = vector.broadcast %cst_5 : f32 to vector<256x48xf32>
    %7 = arith.maximumf %5, %6 : vector<256x48xf32>
    %8 = arith.truncf %7 : vector<256x48xf32> to vector<256x48xbf16>
    %c0_6 = arith.constant 0 : index
    %c0_7 = arith.constant 0 : index
    %9 = vector.load %arg5[%c0_6, %c0_7] : memref<48x96xbf16, #tpu.memory_space<vmem>>, vector<48x96xbf16>
    %cst_8 = arith.constant dense<0.000000e+00> : vector<256x96xf32>
    %10 = tpu.matmul %8, %9, %cst_8 {dimension_numbers = #tpu.dot_dimension_numbers<[1], [0], [0], [1], [0, 0, 1, 1], [], []>} : vector<256x48xbf16>, vector<48x96xbf16>, vector<256x96xf32> -> vector<256x96xf32>
    %c0_9 = arith.constant 0 : index
    %c0_10 = arith.constant 0 : index
    %11 = vector.load %arg2[%c0_9, %c0_10] : memref<256x96xbf16, #tpu.memory_space<vmem>>, vector<256x96xbf16>
    %12 = arith.extf %11 : vector<256x96xbf16> to vector<256x96xf32>
    %13 = arith.addf %10, %12 : vector<256x96xf32>
    %c0_11 = arith.constant 0 : index
    %c0_12 = arith.constant 0 : index
    %14 = vector.load %arg6[%c0_11, %c0_12] : memref<1x96xf32, #tpu.memory_space<vmem>>, vector<1x96xf32>
    %15 = vector.broadcast %14 : vector<1x96xf32> to vector<256x96xf32>
    %16 = arith.addf %13, %15 : vector<256x96xf32>
    %cst_13 = arith.constant 0.000000e+00 : f32
    %17 = vector.broadcast %cst_13 : f32 to vector<256x96xf32>
    %18 = arith.maximumf %16, %17 : vector<256x96xf32>
    %19 = arith.truncf %18 : vector<256x96xf32> to vector<256x96xbf16>
    %c0_14 = arith.constant 0 : index
    %c0_15 = arith.constant 0 : index
    %20 = vector.load %arg7[%c0_14, %c0_15] : memref<96x128xbf16, #tpu.memory_space<vmem>>, vector<96x128xbf16>
    %cst_16 = arith.constant dense<0.000000e+00> : vector<256x128xf32>
    %21 = tpu.matmul %19, %20, %cst_16 {dimension_numbers = #tpu.dot_dimension_numbers<[1], [0], [0], [1], [0, 0, 1, 1], [], []>} : vector<256x96xbf16>, vector<96x128xbf16>, vector<256x128xf32> -> vector<256x128xf32>
    %c0_17 = arith.constant 0 : index
    %c0_18 = arith.constant 0 : index
    %22 = vector.load %arg8[%c0_17, %c0_18] : memref<1x128xf32, #tpu.memory_space<vmem>>, vector<1x128xf32>
    %23 = vector.broadcast %22 : vector<1x128xf32> to vector<256x128xf32>
    %24 = arith.addf %21, %23 : vector<256x128xf32>
    %cst_19 = arith.constant 0.000000e+00 : f32
    %25 = vector.broadcast %cst_19 : f32 to vector<256x128xf32>
    %26 = arith.maximumf %24, %25 : vector<256x128xf32>
    %27 = arith.truncf %26 : vector<256x128xf32> to vector<256x128xbf16>
    %c0_20 = arith.constant 0 : index
    %c0_21 = arith.constant 0 : index
    %28 = vector.load %arg9[%c0_20, %c0_21] : memref<256x128xbf16, #tpu.memory_space<vmem>>, vector<256x128xbf16>
    tpu.vector_store %arg9[%c0_20, %c0_21], %27 {strides = array<i32>} : memref<256x128xbf16, #tpu.memory_space<vmem>>, vector<256x128xbf16>,
    return
  }
  func.func @transform_0(%arg0: i32) -> (i32, i32) {
    %c0_i32 = arith.constant 0 : i32
    %c0_i32_0 = arith.constant 0 : i32
    return %arg0, %c0_i32 : i32, i32
  }
  func.func @transform_1(%arg0: i32) -> (i32, i32) {
    %c0_i32 = arith.constant 0 : i32
    %c0_i32_0 = arith.constant 0 : i32
    return %arg0, %c0_i32 : i32, i32
  }
  func.func @transform_2(%arg0: i32) -> (i32, i32) {
    %c0_i32 = arith.constant 0 : i32
    %c0_i32_0 = arith.constant 0 : i32
    %c0_i32_1 = arith.constant 0 : i32
    return %c0_i32, %c0_i32_0 : i32, i32
  }
  func.func @transform_3(%arg0: i32) -> (i32, i32) {
    %c0_i32 = arith.constant 0 : i32
    %c0_i32_0 = arith.constant 0 : i32
    %c0_i32_1 = arith.constant 0 : i32
    return %c0_i32, %c0_i32_0 : i32, i32
  }
  func.func @transform_4(%arg0: i32) -> (i32, i32) {
    %c0_i32 = arith.constant 0 : i32
    %c0_i32_0 = arith.constant 0 : i32
    %c0_i32_1 = arith.constant 0 : i32
    return %c0_i32, %c0_i32_0 : i32, i32
  }
  func.func @transform_5(%arg0: i32) -> (i32, i32) {
    %c0_i32 = arith.constant 0 : i32
    %c0_i32_0 = arith.constant 0 : i32
    %c0_i32_1 = arith.constant 0 : i32
    return %c0_i32, %c0_i32_0 : i32, i32
  }
  func.func @transform_6(%arg0: i32) -> (i32, i32) {
    %c0_i32 = arith.constant 0 : i32
    %c0_i32_0 = arith.constant 0 : i32
    %c0_i32_1 = arith.constant 0 : i32
    return %c0_i32, %c0_i32_0 : i32, i32
  }
  func.func @transform_7(%arg0: i32) -> (i32, i32) {
    %c0_i32 = arith.constant 0 : i32
    %c0_i32_0 = arith.constant 0 : i32
    %c0_i32_1 = arith.constant 0 : i32
    return %c0_i32, %c0_i32_0 : i32, i32
  }
  func.func @transform_8(%arg0: i32) -> (i32, i32) {
    %c0_i32 = arith.constant 0 : i32
    %c0_i32_0 = arith.constant 0 : i32
    return %arg0, %c0_i32 : i32, i32
  }
}

</mosaic_0001>

<llo_original>
// kernel: final_cls_forward.1
$region0: #{final_cls_forward.1}
  #allocation0 [shape = 'u32[]', space=smem, size = 0x4, offset = 0x4, fixed_abs, tag = 'smem constant byte address 0x4 - core index']
  #allocation1 [shape = 'u32[72,128]{1,0:T(1,128)}', space=vmem, size = 0x9000, scoped, tag = 'internal scratch']
  %s0 = inlined_call_operand.vmem [shape: bf16[512,256], index: 0, kind: input, shape index: {}]
  %s1 = inlined_call_operand.vmem [shape: bf16[512,96], index: 1, kind: input, shape index: {}]
  %s2 = inlined_call_operand.vmem [shape: bf16[256,48], index: 2, kind: input, shape index: {}]
  %s3 = inlined_call_operand.vmem [shape: f32[1,48], index: 3, kind: input, shape index: {}]
  %s4 = inlined_call_operand.vmem [shape: bf16[48,96], index: 4, kind: input, shape index: {}]
  %s5 = inlined_call_operand.vmem [shape: f32[1,96], index: 5, kind: input, shape index: {}]
  %s6 = inlined_call_operand.vmem [shape: bf16[96,128], index: 6, kind: input, shape index: {}]
  %s7 = inlined_call_operand.vmem [shape: f32[1,128], index: 7, kind: input, shape index: {}]
  %s8 = inlined_call_operand.vmem [shape: bf16[512,128], index: 8, kind: output, shape index: {}]
  %s9 = sld [smem:[#allocation0]]
  $region65: #{final_cls_forward.1} parent=0
    _
  %s11 = ssub.s32 1, %s9
  %s12 = scalar_select 0, %s11, %s9
  loop: start=0, step=1, limit=4
  $region2: #{final_cls_forward.1} parent=0 // loop_pre_header
    _
  $region3: #{final_cls_forward.1} parent=0 // loop_header
    %s14 = sphi 0, %s18
    %p15 = scmp.ge.s32.totalorder %s14, 4
    %s24 = sphi 0, %s26
    %s27 = sphi 0, %s24
    %s28 = sphi 0, %s27
    %s44 = sphi 0, %s28
    %s50 = sphi 0, %s52
    %s53 = sphi 0, %s50
    %s54 = sphi 0, %s53
    %s70 = sphi 0, %s54
    %s74 = sphi 0, %s74
    %s76 = sphi 0, %s74
    %s77 = sphi 0, %s76
    %s91 = sphi 0, %s77
    %s95 = sphi 0, %s95
    %s97 = sphi 0, %s95
    %s98 = sphi 0, %s97
    %s112 = sphi 0, %s98
    %s116 = sphi 0, %s116
    %s118 = sphi 0, %s116
    %s119 = sphi 0, %s118
    %s133 = sphi 0, %s119
    %s137 = sphi 0, %s137
    %s139 = sphi 0, %s137
    %s140 = sphi 0, %s139
    %s154 = sphi 0, %s140
    %s158 = sphi 0, %s158
    %s160 = sphi 0, %s158
    %s161 = sphi 0, %s160
    %s175 = sphi 0, %s161
    %s179 = sphi 0, %s179
    %s181 = sphi 0, %s179
    %s182 = sphi 0, %s181
    %s196 = sphi 0, %s182
    %s202 = sphi 0, %s204
    %s205 = sphi 0, %s202
    %s206 = sphi 0, %s205
    %s222 = sphi 0, %s206
  $region4: #{final_cls_forward.1} parent=0 // loop_header_branch
    %17 = sbr.rel (%p15) target = $region8
  $region5: #{final_cls_forward.1} parent=0 // loop_body
    %s19 = ssub.s32 %s14, 1
    %s20 = ssub.s32 %s14, 2
    %s21 = sadd.s32 %s14, 1
    %s22 = ssub.s32 %s14, %s21
    %p23 = scmp.eq.s32.totalorder %s22, 0
    %s25 = sadd.s32 %s24, 1
    %s26 = scalar_select %p23, %s24, %s25
    %p29 = pneg %p23
    %p30 = scmp.eq.s32.totalorder %s14, 1
    %p31 = por %p29, %p30
    %p32 = scmp.ne.s32.totalorder %s24, %s27
    %p33 = scmp.eq.s32.totalorder %s14, 0
    %p34 = por %p32, %p33
    %p35 = scmp.ne.s32.totalorder %s24, %s27
    %p36 = scmp.eq.s32.totalorder %s19, 1
    %p37 = por %p35, %p36
    %p38 = scmp.ne.s32.totalorder %s27, %s28
    %p39 = scmp.eq.s32.totalorder %s19, 0
    %p40 = por %p38, %p39
    %p41 = scmp.ne.s32.totalorder %s27, %s28
    %p42 = scmp.eq.s32.totalorder %s20, 1
    %p43 = por %p41, %p42
    %p45 = scmp.ne.s32.totalorder %s28, %s44
    %p46 = scmp.eq.s32.totalorder %s20, 0
    %p47 = por %p45, %p46
    %s48 = ssub.s32 %s14, %s21
    %p49 = scmp.eq.s32.totalorder %s48, 0
    %s51 = sadd.s32 %s50, 1
    %s52 = scalar_select %p49, %s50, %s51
    %p55 = pneg %p49
    %p56 = scmp.eq.s32.totalorder %s14, 1
    %p57 = por %p55, %p56
    %p58 = scmp.ne.s32.totalorder %s50, %s53
    %p59 = scmp.eq.s32.totalorder %s14, 0
    %p60 = por %p58, %p59
    %p61 = scmp.ne.s32.totalorder %s50, %s53
    %p62 = scmp.eq.s32.totalorder %s19, 1
    %p63 = por %p61, %p62
    %p64 = scmp.ne.s32.totalorder %s53, %s54
    %p65 = scmp.eq.s32.totalorder %s19, 0
    %p66 = por %p64, %p65
    %p67 = scmp.ne.s32.totalorder %s53, %s54
    %p68 = scmp.eq.s32.totalorder %s20, 1
    %p69 = por %p67, %p68
    %p71 = scmp.ne.s32.totalorder %s54, %s70
    %p72 = scmp.eq.s32.totalorder %s20, 0
    %p73 = por %p71, %p72
    %s75 = sadd.s32 %s74, 1
    %p78 = scmp.eq.s32.totalorder %s14, 1
    %p79 = scmp.ne.s32.totalorder %s74, %s76
    %p80 = scmp.eq.s32.totalorder %s14, 0
    %p81 = por %p79, %p80
    %p82 = scmp.ne.s32.totalorder %s74, %s76
    %p83 = scmp.eq.s32.totalorder %s19, 1
    %p84 = por %p82, %p83
    %p85 = scmp.ne.s32.totalorder %s76, %s77
    %p86 = scmp.eq.s32.totalorder %s19, 0
    %p87 = por %p85, %p86
    %p88 = scmp.ne.s32.totalorder %s76, %s77
    %p89 = scmp.eq.s32.totalorder %s20, 1
    %p90 = por %p88, %p89
    %p92 = scmp.ne.s32.totalorder %s77, %s91
    %p93 = scmp.eq.s32.totalorder %s20, 0
    %p94 = por %p92, %p93
    %s96 = sadd.s32 %s95, 1
    %p99 = scmp.eq.s32.totalorder %s14, 1
    %p100 = scmp.ne.s32.totalorder %s95, %s97
    %p101 = scmp.eq.s32.totalorder %s14, 0
    %p102 = por %p100, %p101
    %p103 = scmp.ne.s32.totalorder %s95, %s97
    %p104 = scmp.eq.s32.totalorder %s19, 1
    %p105 = por %p103, %p104
    %p106 = scmp.ne.s32.totalorder %s97, %s98
    %p107 = scmp.eq.s32.totalorder %s19, 0
    %p108 = por %p106, %p107
    %p109 = scmp.ne.s32.totalorder %s97, %s98
    %p110 = scmp.eq.s32.totalorder %s20, 1
    %p111 = por %p109, %p110
    %p113 = scmp.ne.s32.totalorder %s98, %s112
    %p114 = scmp.eq.s32.totalorder %s20, 0
    %p115 = por %p113, %p114
    %s117 = sadd.s32 %s116, 1
    %p120 = scmp.eq.s32.totalorder %s14, 1
    %p121 = scmp.ne.s32.totalorder %s116, %s118
    %p122 = scmp.eq.s32.totalorder %s14, 0
    %p123 = por %p121, %p122
    %p124 = scmp.ne.s32.totalorder %s116, %s118
    %p125 = scmp.eq.s32.totalorder %s19, 1
    %p126 = por %p124, %p125
    %p127 = scmp.ne.s32.totalorder %s118, %s119
    %p128 = scmp.eq.s32.totalorder %s19, 0
    %p129 = por %p127, %p128
    %p130 = scmp.ne.s32.totalorder %s118, %s119
    %p131 = scmp.eq.s32.totalorder %s20, 1
    %p132 = por %p130, %p131
    %p134 = scmp.ne.s32.totalorder %s119, %s133
    %p135 = scmp.eq.s32.totalorder %s20, 0
    %p136 = por %p134, %p135
    %s138 = sadd.s32 %s137, 1
    %p141 = scmp.eq.s32.totalorder %s14, 1
    %p142 = scmp.ne.s32.totalorder %s137, %s139
    %p143 = scmp.eq.s32.totalorder %s14, 0
    %p144 = por %p142, %p143
    %p145 = scmp.ne.s32.totalorder %s137, %s139
    %p146 = scmp.eq.s32.totalorder %s19, 1
    %p147 = por %p145, %p146
    %p148 = scmp.ne.s32.totalorder %s139, %s140
    %p149 = scmp.eq.s32.totalorder %s19, 0
    %p150 = por %p148, %p149
    %p151 = scmp.ne.s32.totalorder %s139, %s140
    %p152 = scmp.eq.s32.totalorder %s20, 1
    %p153 = por %p151, %p152
    %p155 = scmp.ne.s32.totalorder %s140, %s154
    %p156 = scmp.eq.s32.totalorder %s20, 0
    %p157 = por %p155, %p156
    %s159 = sadd.s32 %s158, 1
    %p162 = scmp.eq.s32.totalorder %s14, 1
    %p163 = scmp.ne.s32.totalorder %s158, %s160
    %p164 = scmp.eq.s32.totalorder %s14, 0
    %p165 = por %p163, %p164
    %p166 = scmp.ne.s32.totalorder %s158, %s160
    %p167 = scmp.eq.s32.totalorder %s19, 1
    %p168 = por %p166, %p167
    %p169 = scmp.ne.s32.totalorder %s160, %s161
    %p170 = scmp.eq.s32.totalorder %s19, 0
    %p171 = por %p169, %p170
    %p172 = scmp.ne.s32.totalorder %s160, %s161
    %p173 = scmp.eq.s32.totalorder %s20, 1
    %p174 = por %p172, %p173
    %p176 = scmp.ne.s32.totalorder %s161, %s175
    %p177 = scmp.eq.s32.totalorder %s20, 0
    %p178 = por %p176, %p177
    %s180 = sadd.s32 %s179, 1
    %p183 = scmp.eq.s32.totalorder %s14, 1
    %p184 = scmp.ne.s32.totalorder %s179, %s181
    %p185 = scmp.eq.s32.totalorder %s14, 0
    %p186 = por %p184, %p185
    %p187 = scmp.ne.s32.totalorder %s179, %s181
    %p188 = scmp.eq.s32.totalorder %s19, 1
    %p189 = por %p187, %p188
    %p190 = scmp.ne.s32.totalorder %s181, %s182
    %p191 = scmp.eq.s32.totalorder %s19, 0
    %p192 = por %p190, %p191
    %p193 = scmp.ne.s32.totalorder %s181, %s182
    %p194 = scmp.eq.s32.totalorder %s20, 1
    %p195 = por %p193, %p194
    %p197 = scmp.ne.s32.totalorder %s182, %s196
    %p198 = scmp.eq.s32.totalorder %s20, 0
    %p199 = por %p197, %p198
    %s200 = ssub.s32 %s14, %s21
    %p201 = scmp.eq.s32.totalorder %s200, 0
    %s203 = sadd.s32 %s202, 1
    %s204 = scalar_select %p201, %s202, %s203
    %p207 = pneg %p201
    %p208 = scmp.eq.s32.totalorder %s14, 1
    %p209 = por %p207, %p208
    %p210 = scmp.ne.s32.totalorder %s202, %s205
    %p211 = scmp.eq.s32.totalorder %s14, 0
    %p212 = por %p210, %p211
    %p213 = scmp.ne.s32.totalorder %s202, %s205
    %p214 = scmp.eq.s32.totalorder %s19, 1
    %p215 = por %p213, %p214
    %p216 = scmp.ne.s32.totalorder %s205, %s206
    %p217 = scmp.eq.s32.totalorder %s19, 0
    %p218 = por %p216, %p217
    %p219 = scmp.ne.s32.totalorder %s205, %s206
    %p220 = scmp.eq.s32.totalorder %s20, 1
    %p221 = por %p219, %p220
    %p223 = scmp.ne.s32.totalorder %s206, %s222
    %p224 = scmp.eq.s32.totalorder %s20, 0
    %p225 = por %p223, %p224
    %p226 = scmp.le.s32.totalorder 1, %s14
    %p227 = scmp.lt.s32.totalorder %s14, 3
    %p228 = pnand %p226, %p227
    %p229 = pneg %p228
    // Predicated region
    $region9: #{final_cls_forward.1} parent=5 // pred_check
      _
    $region10: #{final_cls_forward.1} parent=5 // pred_check_branch
      %231 = sbr.rel (%p228) target = $region12
    $region11: #{final_cls_forward.1} parent=5 // pred_region
      %s232 = ssub.s32 %s14, 1
      // Predicated region
      $region13: #{final_cls_forward.1} parent=11 // pred_check
        %p233 = pneg %p87
      $region14: #{final_cls_forward.1} parent=11 // pred_check_branch
        %235 = sbr.rel (%p233) target = $region16
      $region15: #{final_cls_forward.1} parent=11 // pred_region
        _
      $region16: #{final_cls_forward.1} parent=11 // pred_fallthru
        _
      // Predicated region
      $region17: #{final_cls_forward.1} parent=11 // pred_check
        %p236 = pneg %p108
      $region18: #{final_cls_forward.1} parent=11 // pred_check_branch
        %238 = sbr.rel (%p236) target = $region20
      $region19: #{final_cls_forward.1} parent=11 // pred_region
        _
      $region20: #{final_cls_forward.1} parent=11 // pred_fallthru
        _
      // Predicated region
      $region21: #{final_cls_forward.1} parent=11 // pred_check
        %p239 = pneg %p129
      $region22: #{final_cls_forward.1} parent=11 // pred_check_branch
        %241 = sbr.rel (%p239) target = $region24
      $region23: #{final_cls_forward.1} parent=11 // pred_region
        _
      $region24: #{final_cls_forward.1} parent=11 // pred_fallthru
        _
      // Predicated region
      $region25: #{final_cls_forward.1} parent=11 // pred_check
        %p242 = pneg %p150
      $region26: #{final_cls_forward.1} parent=11 // pred_check_branch
        %244 = sbr.rel (%p242) target = $region28
      $region27: #{final_cls_forward.1} parent=11 // pred_region
        _
      $region28: #{final_cls_forward.1} parent=11 // pred_fallthru
        _
      // Predicated region
      $region29: #{final_cls_forward.1} parent=11 // pred_check
        %p245 = pneg %p171
      $region30: #{final_cls_forward.1} parent=11 // pred_check_branch
        %247 = sbr.rel (%p245) target = $region32
      $region31: #{final_cls_forward.1} parent=11 // pred_region
        _
      $region32: #{final_cls_forward.1} parent=11 // pred_fallthru
        _
      // Predicated region
      $region33: #{final_cls_forward.1} parent=11 // pred_check
        %p248 = pneg %p192
      $region34: #{final_cls_forward.1} parent=11 // pred_check_branch
        %250 = sbr.rel (%p248) target = $region36
      $region35: #{final_cls_forward.1} parent=11 // pred_region
        _
      $region36: #{final_cls_forward.1} parent=11 // pred_fallthru
        _
    $region12: #{final_cls_forward.1} parent=5 // pred_fallthru
      _
    %p251 = scmp.lt.s32.totalorder %s14, 2
    // Predicated region
    $region37: #{final_cls_forward.1} parent=5 // pred_check
      %p252 = pneg %p251
    $region38: #{final_cls_forward.1} parent=5 // pred_check_branch
      %254 = sbr.rel (%p252) target = $region40
    $region39: #{final_cls_forward.1} parent=5 // pred_region
      // Predicated region
      $region41: #{final_cls_forward.1} parent=39 // pred_check
        %p255 = pneg %p34
      $region42: #{final_cls_forward.1} parent=39 // pred_check_branch
        %257 = sbr.rel (%p255) target = $region44
      $region43: #{final_cls_forward.1} parent=39 // pred_region
        %s258 = smul.u32 32, %s14
        %p259 = scmp.lt.s32.totalorder %s258, 63
        %s260 = scalar_select %p259, %s258, 63
        %s261 = smul.addr %s260, 2
        %s262 = smul.addr %s261, 4
        %s263 = scalar_lea.vmem %s0, %s262
        %s264 = smul.u32 32, %s14
      $region44: #{final_cls_forward.1} parent=39 // pred_fallthru
        _
      // Predicated region
      $region45: #{final_cls_forward.1} parent=39 // pred_check
        %p265 = pneg %p60
      $region46: #{final_cls_forward.1} parent=39 // pred_check_branch
        %267 = sbr.rel (%p265) target = $region48
      $region47: #{final_cls_forward.1} parent=39 // pred_region
        %s268 = smul.u32 32, %s14
        %p269 = scmp.lt.s32.totalorder %s268, 63
        %s270 = scalar_select %p269, %s268, 63
        %s271 = smul.addr %s270, 4
        %s272 = scalar_lea.vmem %s1, %s271
        %s273 = smul.u32 32, %s14
      $region48: #{final_cls_forward.1} parent=39 // pred_fallthru
        _
    $region40: #{final_cls_forward.1} parent=5 // pred_fallthru
      _
    %p274 = scmp.le.s32.totalorder 1, %s14
    %p275 = scmp.lt.s32.totalorder %s14, 3
    %p276 = pnand %p274, %p275
    %p277 = pneg %p276
    // Predicated region
    $region49: #{final_cls_forward.1} parent=5 // pred_check
      _
    $region50: #{final_cls_forward.1} parent=5 // pred_check_branch
      %279 = sbr.rel (%p276) target = $region52
    $region51: #{final_cls_forward.1} parent=5 // pred_region
      %s280 = ssub.s32 %s14, 1
      %s281 = smul.u32 32, %s19
      %p282 = scmp.lt.s32.totalorder %s281, 63
      %s283 = scalar_select %p282, %s281, 63
      %s284 = smul.addr %s283, 2
      %s285 = smul.addr %s284, 4
      %s286 = scalar_lea.vmem %s0, %s285
      %p287 = pneg %p40
      %p288 = pneg %p37
      %s289 = smul.u32 32, %s19
      %p290 = scmp.lt.s32.totalorder %s289, 63
      %s291 = scalar_select %p290, %s289, 63
      %s292 = smul.addr %s291, 4
      %s293 = scalar_lea.vmem %s1, %s292
      %p294 = pneg %p66
      %p295 = pneg %p63
      %p296 = pneg %p87
      %p297 = pneg %p84
      %p298 = pneg %p108
      %p299 = pneg %p105
      %p300 = pneg %p129
      %p301 = pneg %p126
      %p302 = pneg %p150
      %p303 = pneg %p147
      %p304 = pneg %p171
      %p305 = pneg %p168
      %p306 = pneg %p192
      %p307 = pneg %p189
      %p308 = pneg %p218
      %p309 = pneg %p215
      %s310 = smul.u32 32, %s19
      %p311 = scmp.lt.s32.totalorder %s310, 63
      %s312 = scalar_select %p311, %s310, 63
      %s313 = smul.addr %s312, 4
      %s314 = scalar_lea.vmem %s8, %s313
      %s315 = smul.u32 32, %s19
      %p316 = scmp.lt.s32.totalorder %s315, 63
      %s317 = scalar_select %p316, %s315, 63
      %s318 = smul.addr %s317, 2
      %s319 = smul.addr %s318, 4
      %s320 = scalar_lea.vmem %s0, %s319
      %s321 = smul.u32 32, %s19
      %s322 = smul.u32 32, %s19
      %p323 = scmp.lt.s32.totalorder %s322, 63
      %s324 = scalar_select %p323, %s322, 63
      %s325 = smul.addr %s324, 4
      %s326 = scalar_lea.vmem %s1, %s325
      %s327 = smul.u32 32, %s19
      %s328 = smul.u32 32, %s19
      %p329 = scmp.lt.s32.totalorder %s328, 63
      %s330 = scalar_select %p329, %s328, 63
      %s331 = smul.addr %s330, 4
      %s332 = scalar_lea.vmem %s8, %s331
      %s333 = smul.u32 32, %s19
      %v335 = vld [vmem:[%s320] sm:$0xff]
      %v336 = vld [vmem:[%s320 + $0x8] sm:$0xff]
      %v337 = vld [vmem:[%s320 + $0x10] sm:$0xff]
      %v338 = vld [vmem:[%s320 + $0x18] sm:$0xff]
      %v339 = vld [vmem:[%s320 + $0x20] sm:$0xff]
      %v340 = vld [vmem:[%s320 + $0x28] sm:$0xff]
      %v341 = vld [vmem:[%s320 + $0x30] sm:$0xff]
      %v342 = vld [vmem:[%s320 + $0x38] sm:$0xff]
      %v343 = vld [vmem:[%s320 + $0x40] sm:$0xff]
      %v344 = vld [vmem:[%s320 + $0x48] sm:$0xff]
      %v345 = vld [vmem:[%s320 + $0x50] sm:$0xff]
      %v346 = vld [vmem:[%s320 + $0x58] sm:$0xff]
      %v347 = vld [vmem:[%s320 + $0x60] sm:$0xff]
      %v348 = vld [vmem:[%s320 + $0x68] sm:$0xff]
      %v349 = vld [vmem:[%s320 + $0x70] sm:$0xff]
      %v350 = vld [vmem:[%s320 + $0x78] sm:$0xff]
      %v351 = vld [vmem:[%s320 + $0x80] sm:$0xff]
      %v352 = vld [vmem:[%s320 + $0x88] sm:$0xff]
      %v353 = vld [vmem:[%s320 + $0x90] sm:$0xff]
      %v354 = vld [vmem:[%s320 + $0x98] sm:$0xff]
      %v355 = vld [vmem:[%s320 + $0xa0] sm:$0xff]
      %v356 = vld [vmem:[%s320 + $0xa8] sm:$0xff]
      %v357 = vld [vmem:[%s320 + $0xb0] sm:$0xff]
      %v358 = vld [vmem:[%s320 + $0xb8] sm:$0xff]
      %v359 = vld [vmem:[%s320 + $0xc0] sm:$0xff]
      %v360 = vld [vmem:[%s320 + $0xc8] sm:$0xff]
      %v361 = vld [vmem:[%s320 + $0xd0] sm:$0xff]
      %v362 = vld [vmem:[%s320 + $0xd8] sm:$0xff]
      %v363 = vld [vmem:[%s320 + $0xe0] sm:$0xff]
      %v364 = vld [vmem:[%s320 + $0xe8] sm:$0xff]
      %v365 = vld [vmem:[%s320 + $0xf0] sm:$0xff]
      %v366 = vld [vmem:[%s320 + $0xf8] sm:$0xff]
      %v367 = vld [vmem:[%s2] sm:$0xf]
      %v368 = vld [vmem:[%s2 + $0x4] sm:$0xf]
      %v369 = vld [vmem:[%s2 + $0x8] sm:$0xf]
      %v370 = vld [vmem:[%s2 + $0xc] sm:$0xf]
      %v371 = vld [vmem:[%s2 + $0x10] sm:$0xf]
      %v372 = vld [vmem:[%s2 + $0x14] sm:$0xf]
      %v373 = vld [vmem:[%s2 + $0x18] sm:$0xf]
      %v374 = vld [vmem:[%s2 + $0x1c] sm:$0xf]
      %v375 = vld [vmem:[%s2 + $0x20] sm:$0xf]
      %v376 = vld [vmem:[%s2 + $0x24] sm:$0xf]
      %v377 = vld [vmem:[%s2 + $0x28] sm:$0xf]
      %v378 = vld [vmem:[%s2 + $0x2c] sm:$0xf]
      %v379 = vld [vmem:[%s2 + $0x30] sm:$0xf]
      %v380 = vld [vmem:[%s2 + $0x34] sm:$0xf]
      %v381 = vld [vmem:[%s2 + $0x38] sm:$0xf]
      %v382 = vld [vmem:[%s2 + $0x3c] sm:$0xf]
      %v383 = vld [vmem:[%s2 + $0x40] sm:$0xf]
      %v384 = vld [vmem:[%s2 + $0x44] sm:$0xf]
      %v385 = vld [vmem:[%s2 + $0x48] sm:$0xf]
      %v386 = vld [vmem:[%s2 + $0x4c] sm:$0xf]
      %v387 = vld [vmem:[%s2 + $0x50] sm:$0xf]
      %v388 = vld [vmem:[%s2 + $0x54] sm:$0xf]
      %v389 = vld [vmem:[%s2 + $0x58] sm:$0xf]
      %v390 = vld [vmem:[%s2 + $0x5c] sm:$0xf]
      %v391 = vld [vmem:[%s2 + $0x60] sm:$0xf]
      %v392 = vld [vmem:[%s2 + $0x64] sm:$0xf]
      %v393 = vld [vmem:[%s2 + $0x68] sm:$0xf]
      %v394 = vld [vmem:[%s2 + $0x6c] sm:$0xf]
      %v395 = vld [vmem:[%s2 + $0x70] sm:$0xf]
      %v396 = vld [vmem:[%s2 + $0x74] sm:$0xf]
      %v397 = vld [vmem:[%s2 + $0x78] sm:$0xf]
      %v398 = vld [vmem:[%s2 + $0x7c] sm:$0xf]
      %v399 = vld [vmem:[%s3] sm:$0x1]
      %v401 = vperm.slane %v399, 0
      %v435 = vunpack.c.l.b16 %v335
      %v436 = vunpack.c.h.b16 %v335
      %v437 = vunpack.c.l.b16 %v336
      %v438 = vunpack.c.h.b16 %v336
      %v439 = vunpack.c.l.b16 %v337
      %v440 = vunpack.c.h.b16 %v337
      %v441 = vunpack.c.l.b16 %v338
      %v442 = vunpack.c.h.b16 %v338
      %v443 = vunpack.c.l.b16 %v339
      %v444 = vunpack.c.h.b16 %v339
      %v445 = vunpack.c.l.b16 %v340
      %v446 = vunpack.c.h.b16 %v340
      %v447 = vunpack.c.l.b16 %v341
      %v448 = vunpack.c.h.b16 %v341
      %v449 = vunpack.c.l.b16 %v342
      %v450 = vunpack.c.h.b16 %v342
      %v451 = vunpack.c.l.b16 %v343
      %v452 = vunpack.c.h.b16 %v343
      %v453 = vunpack.c.l.b16 %v344
      %v454 = vunpack.c.h.b16 %v344
      %v455 = vunpack.c.l.b16 %v345
      %v456 = vunpack.c.h.b16 %v345
      %v457 = vunpack.c.l.b16 %v346
      %v458 = vunpack.c.h.b16 %v346
      %v459 = vunpack.c.l.b16 %v347
      %v460 = vunpack.c.h.b16 %v347
      %v461 = vunpack.c.l.b16 %v348
      %v462 = vunpack.c.h.b16 %v348
      %v463 = vunpack.c.l.b16 %v349
      %v464 = vunpack.c.h.b16 %v349
      %v465 = vunpack.c.l.b16 %v350
      %v466 = vunpack.c.h.b16 %v350
      %v467 = vunpack.c.l.b16 %v351
      %v468 = vunpack.c.h.b16 %v351
      %v469 = vunpack.c.l.b16 %v352
      %v470 = vunpack.c.h.b16 %v352
      %v471 = vunpack.c.l.b16 %v353
      %v472 = vunpack.c.h.b16 %v353
      %v473 = vunpack.c.l.b16 %v354
      %v474 = vunpack.c.h.b16 %v354
      %v475 = vunpack.c.l.b16 %v355
      %v476 = vunpack.c.h.b16 %v355
      %v477 = vunpack.c.l.b16 %v356
      %v478 = vunpack.c.h.b16 %v356
      %v479 = vunpack.c.l.b16 %v357
      %v480 = vunpack.c.h.b16 %v357
      %v481 = vunpack.c.l.b16 %v358
      %v482 = vunpack.c.h.b16 %v358
      %v483 = vunpack.c.l.b16 %v359
      %v484 = vunpack.c.h.b16 %v359
      %v485 = vunpack.c.l.b16 %v360
      %v486 = vunpack.c.h.b16 %v360
      %v487 = vunpack.c.l.b16 %v361
      %v488 = vunpack.c.h.b16 %v361
      %v489 = vunpack.c.l.b16 %v362
      %v490 = vunpack.c.h.b16 %v362
      %v491 = vunpack.c.l.b16 %v363
      %v492 = vunpack.c.h.b16 %v363
      %v493 = vunpack.c.l.b16 %v364
      %v494 = vunpack.c.h.b16 %v364
      %v495 = vunpack.c.l.b16 %v365
      %v496 = vunpack.c.h.b16 %v365
      %v497 = vunpack.c.l.b16 %v366
      %v498 = vunpack.c.h.b16 %v366
      %v499 = vpack.c.b16 %v437, %v435
      %v500 = vpack.c.b16 %v438, %v436
      %v501 = vpack.c.b16 %v441, %v439
      %v502 = vpack.c.b16 %v442, %v440
      %v503 = vpack.c.b16 %v445, %v443
      %v504 = vpack.c.b16 %v446, %v444
      %v505 = vpack.c.b16 %v449, %v447
      %v506 = vpack.c.b16 %v450, %v448
      %v507 = vpack.c.b16 %v453, %v451
      %v508 = vpack.c.b16 %v454, %v452
      %v509 = vpack.c.b16 %v457, %v455
      %v510 = vpack.c.b16 %v458, %v456
      %v511 = vpack.c.b16 %v461, %v459
      %v512 = vpack.c.b16 %v462, %v460
      %v513 = vpack.c.b16 %v465, %v463
      %v514 = vpack.c.b16 %v466, %v464
      %v515 = vpack.c.b16 %v469, %v467
      %v516 = vpack.c.b16 %v470, %v468
      %v517 = vpack.c.b16 %v473, %v471
      %v518 = vpack.c.b16 %v474, %v472
      %v519 = vpack.c.b16 %v477, %v475
      %v520 = vpack.c.b16 %v478, %v476
      %v521 = vpack.c.b16 %v481, %v479
      %v522 = vpack.c.b16 %v482, %v480
      %v523 = vpack.c.b16 %v485, %v483
      %v524 = vpack.c.b16 %v486, %v484
      %v525 = vpack.c.b16 %v489, %v487
      %v526 = vpack.c.b16 %v490, %v488
      %v527 = vpack.c.b16 %v493, %v491
      %v528 = vpack.c.b16 %v494, %v492
      %v529 = vpack.c.b16 %v497, %v495
      %v530 = vpack.c.b16 %v498, %v496
      %v595 = vunpack.c.l.b16 %v367
      %v596 = vunpack.c.l.b16 %v368
      %v597 = vunpack.c.l.b16 %v369
      %v598 = vunpack.c.l.b16 %v370
      %v599 = vunpack.c.l.b16 %v371
      %v600 = vunpack.c.l.b16 %v372
      %v601 = vunpack.c.l.b16 %v373
      %v602 = vunpack.c.l.b16 %v374
      %v603 = vunpack.c.l.b16 %v375
      %v604 = vunpack.c.l.b16 %v376
      %v605 = vunpack.c.l.b16 %v377
      %v606 = vunpack.c.l.b16 %v378
      %v607 = vunpack.c.l.b16 %v379
      %v608 = vunpack.c.l.b16 %v380
      %v609 = vunpack.c.l.b16 %v381
      %v610 = vunpack.c.l.b16 %v382
      %v611 = vunpack.c.l.b16 %v383
      %v612 = vunpack.c.l.b16 %v384
      %v613 = vunpack.c.l.b16 %v385
      %v614 = vunpack.c.l.b16 %v386
      %v615 = vunpack.c.l.b16 %v387
      %v616 = vunpack.c.l.b16 %v388
      %v617 = vunpack.c.l.b16 %v389
      %v618 = vunpack.c.l.b16 %v390
      %v619 = vunpack.c.l.b16 %v391
      %v620 = vunpack.c.l.b16 %v392
      %v621 = vunpack.c.l.b16 %v393
      %v622 = vunpack.c.l.b16 %v394
      %v623 = vunpack.c.l.b16 %v395
      %v624 = vunpack.c.l.b16 %v396
      %v625 = vunpack.c.l.b16 %v397
      %v626 = vunpack.c.l.b16 %v398
      %v627 = vpack.c.b16 %v596, %v595
      %v628 = vpack.c.b16 %v598, %v597
      %v629 = vpack.c.b16 %v600, %v599
      %v630 = vpack.c.b16 %v602, %v601
      %v631 = vpack.c.b16 %v604, %v603
      %v632 = vpack.c.b16 %v606, %v605
      %v633 = vpack.c.b16 %v608, %v607
      %v634 = vpack.c.b16 %v610, %v609
      %v635 = vpack.c.b16 %v612, %v611
      %v636 = vpack.c.b16 %v614, %v613
      %v637 = vpack.c.b16 %v616, %v615
      %v638 = vpack.c.b16 %v618, %v617
      %v639 = vpack.c.b16 %v620, %v619
      %v640 = vpack.c.b16 %v622, %v621
      %v641 = vpack.c.b16 %v624, %v623
      %v642 = vpack.c.b16 %v626, %v625
      %659 = vmatpush.bf16.msra.mxu0 %v634
      %660 = vmatpush.bf16.msra.mxu0 %v633
      %661 = vmatpush.bf16.msra.mxu0 %v632
      %662 = vmatpush.bf16.msra.mxu0 %v631
      %663 = vmatpush.bf16.msra.mxu0 %v630
      %664 = vmatpush.bf16.msra.mxu0 %v629
      %665 = vmatpush.bf16.msra.mxu0 %v628
      %666 = vmatpush.bf16.msra.mxu0 %v627
      %667 = vmatmul.bf16.gmra.mxu0 %v499
      %v668 = vpop.f32.mrf.mxu0
      %v669 = vadd.f32 %v401, %v668
      %v670 = vpop.f32.mrf.mxu0
      %v671 = vadd.f32 %v401, %v670
      %672 = vmatmul.bf16.gmra.mxu0 %v501
      %v673 = vpop.f32.mrf.mxu0
      %v674 = vadd.f32 %v401, %v673
      %v675 = vpop.f32.mrf.mxu0
      %v676 = vadd.f32 %v401, %v675
      %677 = vmatmul.bf16.gmra.mxu0 %v503
      %v678 = vpop.f32.mrf.mxu0
      %v679 = vadd.f32 %v401, %v678
      %v680 = vpop.f32.mrf.mxu0
      %v681 = vadd.f32 %v401, %v680
      %682 = vmatmul.bf16.gmra.mxu0 %v505
      %v683 = vpop.f32.mrf.mxu0
      %v684 = vadd.f32 %v401, %v683
      %v685 = vpop.f32.mrf.mxu0
      %v686 = vadd.f32 %v401, %v685
      %687 = vmatmul.bf16.gmra.mxu0 %v507
      %v688 = vpop.f32.mrf.mxu0
      %v689 = vadd.f32 %v401, %v688
      %v690 = vpop.f32.mrf.mxu0
      %v691 = vadd.f32 %v401, %v690
      %692 = vmatmul.bf16.gmra.mxu0 %v509
      %v693 = vpop.f32.mrf.mxu0
      %v694 = vadd.f32 %v401, %v693
      %v695 = vpop.f32.mrf.mxu0
      %v696 = vadd.f32 %v401, %v695
      %697 = vmatmul.bf16.gmra.mxu0 %v511
      %v698 = vpop.f32.mrf.mxu0
      %v699 = vadd.f32 %v401, %v698
      %v700 = vpop.f32.mrf.mxu0
      %v701 = vadd.f32 %v401, %v700
      %702 = vmatmul.bf16.gmra.mxu0 %v513
      %v703 = vpop.f32.mrf.mxu0
      %v704 = vadd.f32 %v401, %v703
      %v705 = vpop.f32.mrf.mxu0
      %v706 = vadd.f32 %v401, %v705
      %707 = vmatmul.bf16.gmra.mxu0 %v515
      %v708 = vpop.f32.mrf.mxu0
      %v709 = vadd.f32 %v401, %v708
      %v710 = vpop.f32.mrf.mxu0
      %v711 = vadd.f32 %v401, %v710
      %712 = vmatmul.bf16.gmra.mxu0 %v517
      %v713 = vpop.f32.mrf.mxu0
      %v714 = vadd.f32 %v401, %v713
      %v715 = vpop.f32.mrf.mxu0
      %v716 = vadd.f32 %v401, %v715
      %717 = vmatmul.bf16.gmra.mxu0 %v519
      %v718 = vpop.f32.mrf.mxu0
      %v719 = vadd.f32 %v401, %v718
      %v720 = vpop.f32.mrf.mxu0
      %v721 = vadd.f32 %v401, %v720
      %722 = vmatmul.bf16.gmra.mxu0 %v521
      %v723 = vpop.f32.mrf.mxu0
      %v724 = vadd.f32 %v401, %v723
      %v725 = vpop.f32.mrf.mxu0
      %v726 = vadd.f32 %v401, %v725
      %727 = vmatmul.bf16.gmra.mxu0 %v523
      %v728 = vpop.f32.mrf.mxu0
      %v729 = vadd.f32 %v401, %v728
      %v730 = vpop.f32.mrf.mxu0
      %v731 = vadd.f32 %v401, %v730
      %732 = vmatmul.bf16.gmra.mxu0 %v525
      %v733 = vpop.f32.mrf.mxu0
      %v734 = vadd.f32 %v401, %v733
      %v735 = vpop.f32.mrf.mxu0
      %v736 = vadd.f32 %v401, %v735
      %737 = vmatmul.bf16.gmra.mxu0 %v527
      %v738 = vpop.f32.mrf.mxu0
      %v739 = vadd.f32 %v401, %v738
      %v740 = vpop.f32.mrf.mxu0
      %v741 = vadd.f32 %v401, %v740
      %742 = vmatmul.bf16.gmra.mxu0 %v529
      %v743 = vpop.f32.mrf.mxu0
      %v744 = vadd.f32 %v401, %v743
      %v745 = vpop.f32.mrf.mxu0
      %v746 = vadd.f32 %v401, %v745
      %747 = vdwg.mxu0
      %748 = vmatpush.bf16.msra.mxu0 %v642
      %749 = vmatpush.bf16.msra.mxu0 %v641
      %750 = vmatpush.bf16.msra.mxu0 %v640
      %751 = vmatpush.bf16.msra.mxu0 %v639
      %752 = vmatpush.bf16.msra.mxu0 %v638
      %753 = vmatpush.bf16.msra.mxu0 %v637
      %754 = vmatpush.bf16.msra.mxu0 %v636
      %755 = vmatpush.bf16.msra.mxu0 %v635
      %756 = vmatmul.bf16.gmra.mxu0 %v500
      %v757 = vpop.f32.mrf.mxu0
      %v758 = vadd.f32 %v669, %v757
      %v759 = vpop.f32.mrf.mxu0
      %v760 = vadd.f32 %v671, %v759
      %761 = vmatmul.bf16.gmra.mxu0 %v502
      %v762 = vpop.f32.mrf.mxu0
      %v763 = vadd.f32 %v674, %v762
      %v764 = vpop.f32.mrf.mxu0
      %v765 = vadd.f32 %v676, %v764
      %766 = vmatmul.bf16.gmra.mxu0 %v504
      %v767 = vpop.f32.mrf.mxu0
      %v768 = vadd.f32 %v679, %v767
      %v769 = vpop.f32.mrf.mxu0
      %v770 = vadd.f32 %v681, %v769
      %771 = vmatmul.bf16.gmra.mxu0 %v506
      %v772 = vpop.f32.mrf.mxu0
      %v773 = vadd.f32 %v684, %v772
      %v774 = vpop.f32.mrf.mxu0
      %v775 = vadd.f32 %v686, %v774
      %776 = vmatmul.bf16.gmra.mxu0 %v508
      %v777 = vpop.f32.mrf.mxu0
      %v778 = vadd.f32 %v689, %v777
      %v779 = vpop.f32.mrf.mxu0
      %v780 = vadd.f32 %v691, %v779
      %781 = vmatmul.bf16.gmra.mxu0 %v510
      %v782 = vpop.f32.mrf.mxu0
      %v783 = vadd.f32 %v694, %v782
      %v784 = vpop.f32.mrf.mxu0
      %v785 = vadd.f32 %v696, %v784
      %786 = vmatmul.bf16.gmra.mxu0 %v512
      %v787 = vpop.f32.mrf.mxu0
      %v788 = vadd.f32 %v699, %v787
      %v789 = vpop.f32.mrf.mxu0
      %v790 = vadd.f32 %v701, %v789
      %791 = vmatmul.bf16.gmra.mxu0 %v514
      %v792 = vpop.f32.mrf.mxu0
      %v793 = vadd.f32 %v704, %v792
      %v794 = vpop.f32.mrf.mxu0
      %v795 = vadd.f32 %v706, %v794
      %796 = vmatmul.bf16.gmra.mxu0 %v516
      %v797 = vpop.f32.mrf.mxu0
      %v798 = vadd.f32 %v709, %v797
      %v799 = vpop.f32.mrf.mxu0
      %v800 = vadd.f32 %v711, %v799
      %801 = vmatmul.bf16.gmra.mxu0 %v518
      %v802 = vpop.f32.mrf.mxu0
      %v803 = vadd.f32 %v714, %v802
      %v804 = vpop.f32.mrf.mxu0
      %v805 = vadd.f32 %v716, %v804
      %806 = vmatmul.bf16.gmra.mxu0 %v520
      %v807 = vpop.f32.mrf.mxu0
      %v808 = vadd.f32 %v719, %v807
      %v809 = vpop.f32.mrf.mxu0
      %v810 = vadd.f32 %v721, %v809
      %811 = vmatmul.bf16.gmra.mxu0 %v522
      %v812 = vpop.f32.mrf.mxu0
      %v813 = vadd.f32 %v724, %v812
      %v814 = vpop.f32.mrf.mxu0
      %v815 = vadd.f32 %v726, %v814
      %816 = vmatmul.bf16.gmra.mxu0 %v524
      %v817 = vpop.f32.mrf.mxu0
      %v818 = vadd.f32 %v729, %v817
      %v819 = vpop.f32.mrf.mxu0
      %v820 = vadd.f32 %v731, %v819
      %821 = vmatmul.bf16.gmra.mxu0 %v526
      %v822 = vpop.f32.mrf.mxu0
      %v823 = vadd.f32 %v734, %v822
      %v824 = vpop.f32.mrf.mxu0
      %v825 = vadd.f32 %v736, %v824
      %826 = vmatmul.bf16.gmra.mxu0 %v528
      %v827 = vpop.f32.mrf.mxu0
      %v828 = vadd.f32 %v739, %v827
      %v829 = vpop.f32.mrf.mxu0
      %v830 = vadd.f32 %v741, %v829
      %831 = vmatmul.bf16.gmra.mxu0 %v530
      %v832 = vpop.f32.mrf.mxu0
      %v833 = vadd.f32 %v744, %v832
      %v834 = vpop.f32.mrf.mxu0
      %v835 = vadd.f32 %v746, %v834
      %836 = vdwg.mxu0
      %v837 = vmax.f32 %v758, 0.0
      %v838 = vmax.f32 %v760, 0.0
      %v839 = vmax.f32 %v763, 0.0
      %v840 = vmax.f32 %v765, 0.0
      %v841 = vmax.f32 %v768, 0.0
      %v842 = vmax.f32 %v770, 0.0
      %v843 = vmax.f32 %v773, 0.0
      %v844 = vmax.f32 %v775, 0.0
      %v845 = vmax.f32 %v778, 0.0
      %v846 = vmax.f32 %v780, 0.0
      %v847 = vmax.f32 %v783, 0.0
      %v848 = vmax.f32 %v785, 0.0
      %v849 = vmax.f32 %v788, 0.0
      %v850 = vmax.f32 %v790, 0.0
      %v851 = vmax.f32 %v793, 0.0
      %v852 = vmax.f32 %v795, 0.0
      %v853 = vmax.f32 %v798, 0.0
      %v854 = vmax.f32 %v800, 0.0
      %v855 = vmax.f32 %v803, 0.0
      %v856 = vmax.f32 %v805, 0.0
      %v857 = vmax.f32 %v808, 0.0
      %v858 = vmax.f32 %v810, 0.0
      %v859 = vmax.f32 %v813, 0.0
      %v860 = vmax.f32 %v815, 0.0
      %v861 = vmax.f32 %v818, 0.0
      %v862 = vmax.f32 %v820, 0.0
      %v863 = vmax.f32 %v823, 0.0
      %v864 = vmax.f32 %v825, 0.0
      %v865 = vmax.f32 %v828, 0.0
      %v866 = vmax.f32 %v830, 0.0
      %v867 = vmax.f32 %v833, 0.0
      %v868 = vmax.f32 %v835, 0.0
      %v869 = vpack.c.bf16 %v838, %v837
      %v870 = vpack.c.bf16 %v840, %v839
      %v871 = vpack.c.bf16 %v842, %v841
      %v872 = vpack.c.bf16 %v844, %v843
      %v873 = vpack.c.bf16 %v846, %v845
      %v874 = vpack.c.bf16 %v848, %v847
      %v875 = vpack.c.bf16 %v850, %v849
      %v876 = vpack.c.bf16 %v852, %v851
      %v877 = vpack.c.bf16 %v854, %v853
      %v878 = vpack.c.bf16 %v856, %v855
      %v879 = vpack.c.bf16 %v858, %v857
      %v880 = vpack.c.bf16 %v860, %v859
      %v881 = vpack.c.bf16 %v862, %v861
      %v882 = vpack.c.bf16 %v864, %v863
      %v883 = vpack.c.bf16 %v866, %v865
      %v884 = vpack.c.bf16 %v868, %v867
      %v885 = vld [vmem:[%s4] sm:$0xf]
      %v886 = vld [vmem:[%s4 + $0x4] sm:$0xf]
      %v887 = vld [vmem:[%s4 + $0x8] sm:$0xf]
      %v888 = vld [vmem:[%s4 + $0xc] sm:$0xf]
      %v889 = vld [vmem:[%s4 + $0x10] sm:$0xf]
      %v890 = vld [vmem:[%s4 + $0x14] sm:$0xf]
      %v891 = vld [vmem:[%s326] sm:$0xf]
      %v892 = vld [vmem:[%s326 + $0x4] sm:$0xf]
      %v893 = vld [vmem:[%s326 + $0x8] sm:$0xf]
      %v894 = vld [vmem:[%s326 + $0xc] sm:$0xf]
      %v895 = vld [vmem:[%s326 + $0x10] sm:$0xf]
      %v896 = vld [vmem:[%s326 + $0x14] sm:$0xf]
      %v897 = vld [vmem:[%s326 + $0x18] sm:$0xf]
      %v898 = vld [vmem:[%s326 + $0x1c] sm:$0xf]
      %v899 = vld [vmem:[%s326 + $0x20] sm:$0xf]
      %v900 = vld [vmem:[%s326 + $0x24] sm:$0xf]
      %v901 = vld [vmem:[%s326 + $0x28] sm:$0xf]
      %v902 = vld [vmem:[%s326 + $0x2c] sm:$0xf]
      %v903 = vld [vmem:[%s326 + $0x30] sm:$0xf]
      %v904 = vld [vmem:[%s326 + $0x34] sm:$0xf]
      %v905 = vld [vmem:[%s326 + $0x38] sm:$0xf]
      %v906 = vld [vmem:[%s326 + $0x3c] sm:$0xf]
      %v907 = vld [vmem:[%s326 + $0x40] sm:$0xf]
      %v908 = vld [vmem:[%s326 + $0x44] sm:$0xf]
      %v909 = vld [vmem:[%s326 + $0x48] sm:$0xf]
      %v910 = vld [vmem:[%s326 + $0x4c] sm:$0xf]
      %v911 = vld [vmem:[%s326 + $0x50] sm:$0xf]
      %v912 = vld [vmem:[%s326 + $0x54] sm:$0xf]
      %v913 = vld [vmem:[%s326 + $0x58] sm:$0xf]
      %v914 = vld [vmem:[%s326 + $0x5c] sm:$0xf]
      %v915 = vld [vmem:[%s326 + $0x60] sm:$0xf]
      %v916 = vld [vmem:[%s326 + $0x64] sm:$0xf]
      %v917 = vld [vmem:[%s326 + $0x68] sm:$0xf]
      %v918 = vld [vmem:[%s326 + $0x6c] sm:$0xf]
      %v919 = vld [vmem:[%s326 + $0x70] sm:$0xf]
      %v920 = vld [vmem:[%s326 + $0x74] sm:$0xf]
      %v921 = vld [vmem:[%s326 + $0x78] sm:$0xf]
      %v922 = vld [vmem:[%s326 + $0x7c] sm:$0xf]
      %v923 = vunpack.c.l.bf16 %v891
      %v924 = vunpack.c.l.bf16 %v892
      %v925 = vunpack.c.l.bf16 %v893
      %v926 = vunpack.c.l.bf16 %v894
      %v927 = vunpack.c.l.bf16 %v895
      %v928 = vunpack.c.l.bf16 %v896
      %v929 = vunpack.c.l.bf16 %v897
      %v930 = vunpack.c.l.bf16 %v898
      %v931 = vunpack.c.l.bf16 %v899
      %v932 = vunpack.c.l.bf16 %v900
      %v933 = vunpack.c.l.bf16 %v901
      %v934 = vunpack.c.l.bf16 %v902
      %v935 = vunpack.c.l.bf16 %v903
      %v936 = vunpack.c.l.bf16 %v904
      %v937 = vunpack.c.l.bf16 %v905
      %v938 = vunpack.c.l.bf16 %v906
      %v939 = vunpack.c.l.bf16 %v907
      %v940 = vunpack.c.l.bf16 %v908
      %v941 = vunpack.c.l.bf16 %v909
      %v942 = vunpack.c.l.bf16 %v910
      %v943 = vunpack.c.l.bf16 %v911
      %v944 = vunpack.c.l.bf16 %v912
      %v945 = vunpack.c.l.bf16 %v913
      %v946 = vunpack.c.l.bf16 %v914
      %v947 = vunpack.c.l.bf16 %v915
      %v948 = vunpack.c.l.bf16 %v916
      %v949 = vunpack.c.l.bf16 %v917
      %v950 = vunpack.c.l.bf16 %v918
      %v951 = vunpack.c.l.bf16 %v919
      %v952 = vunpack.c.l.bf16 %v920
      %v953 = vunpack.c.l.bf16 %v921
      %v954 = vunpack.c.l.bf16 %v922
      %v961 = vunpack.c.l.b16 %v885
      %v962 = vunpack.c.l.b16 %v886
      %v963 = vunpack.c.l.b16 %v887
      %v964 = vunpack.c.l.b16 %v888
      %v965 = vunpack.c.l.b16 %v889
      %v966 = vunpack.c.l.b16 %v890
      %v967 = vpack.c.b16 %v962, %v961
      %v968 = vpack.c.b16 %v964, %v963
      %v969 = vpack.c.b16 %v966, %v965
      %vm973 = vcmask 392192
      %v975 = vsel %vm973, %v869, 0
      %v978 = vsel %vm973, %v870, 0
      %v981 = vsel %vm973, %v871, 0
      %v984 = vsel %vm973, %v872, 0
      %v987 = vsel %vm973, %v873, 0
      %v990 = vsel %vm973, %v874, 0
      %v993 = vsel %vm973, %v875, 0
      %v996 = vsel %vm973, %v876, 0
      %v999 = vsel %vm973, %v877, 0
      %v1002 = vsel %vm973, %v878, 0
      %v1005 = vsel %vm973, %v879, 0
      %v1008 = vsel %vm973, %v880, 0
      %v1011 = vsel %vm973, %v881, 0
      %v1014 = vsel %vm973, %v882, 0
      %v1017 = vsel %vm973, %v883, 0
      %v1020 = vsel %vm973, %v884, 0
      %1022 = vmatpush.bf16.msra.mxu0 0
      %1023 = vmatpush.bf16.msra.mxu0 0
      %1024 = vmatpush.bf16.msra.mxu0 0
      %1025 = vmatpush.bf16.msra.mxu0 0
      %1026 = vmatpush.bf16.msra.mxu0 0
      %1027 = vmatpush.bf16.msra.mxu0 %v969
      %1028 = vmatpush.bf16.msra.mxu0 %v968
      %1029 = vmatpush.bf16.msra.mxu0 %v967
      %1030 = vmatmul.bf16.gmra.mxu0 %v975
      %v1031 = vpop.f32.mrf.mxu0
      %v1032 = vadd.f32 %v923, %v1031
      %v1033 = vpop.f32.mrf.mxu0
      %v1034 = vadd.f32 %v924, %v1033
      %1035 = vmatmul.bf16.gmra.mxu0 %v978
      %v1036 = vpop.f32.mrf.mxu0
      %v1037 = vadd.f32 %v925, %v1036
      %v1038 = vpop.f32.mrf.mxu0
      %v1039 = vadd.f32 %v926, %v1038
      %1040 = vmatmul.bf16.gmra.mxu0 %v981
      %v1041 = vpop.f32.mrf.mxu0
      %v1042 = vadd.f32 %v927, %v1041
      %v1043 = vpop.f32.mrf.mxu0
      %v1044 = vadd.f32 %v928, %v1043
      %1045 = vmatmul.bf16.gmra.mxu0 %v984
      %v1046 = vpop.f32.mrf.mxu0
      %v1047 = vadd.f32 %v929, %v1046
      %v1048 = vpop.f32.mrf.mxu0
      %v1049 = vadd.f32 %v930, %v1048
      %1050 = vmatmul.bf16.gmra.mxu0 %v987
      %v1051 = vpop.f32.mrf.mxu0
      %v1052 = vadd.f32 %v931, %v1051
      %v1053 = vpop.f32.mrf.mxu0
      %v1054 = vadd.f32 %v932, %v1053
      %1055 = vmatmul.bf16.gmra.mxu0 %v990
      %v1056 = vpop.f32.mrf.mxu0
      %v1057 = vadd.f32 %v933, %v1056
      %v1058 = vpop.f32.mrf.mxu0
      %v1059 = vadd.f32 %v934, %v1058
      %1060 = vmatmul.bf16.gmra.mxu0 %v993
      %v1061 = vpop.f32.mrf.mxu0
      %v1062 = vadd.f32 %v935, %v1061
      %v1063 = vpop.f32.mrf.mxu0
      %v1064 = vadd.f32 %v936, %v1063
      %1065 = vmatmul.bf16.gmra.mxu0 %v996
      %v1066 = vpop.f32.mrf.mxu0
      %v1067 = vadd.f32 %v937, %v1066
      %v1068 = vpop.f32.mrf.mxu0
      %v1069 = vadd.f32 %v938, %v1068
      %1070 = vmatmul.bf16.gmra.mxu0 %v999
      %v1071 = vpop.f32.mrf.mxu0
      %v1072 = vadd.f32 %v939, %v1071
      %v1073 = vpop.f32.mrf.mxu0
      %v1074 = vadd.f32 %v940, %v1073
      %1075 = vmatmul.bf16.gmra.mxu0 %v1002
      %v1076 = vpop.f32.mrf.mxu0
      %v1077 = vadd.f32 %v941, %v1076
      %v1078 = vpop.f32.mrf.mxu0
      %v1079 = vadd.f32 %v942, %v1078
      %1080 = vmatmul.bf16.gmra.mxu0 %v1005
      %v1081 = vpop.f32.mrf.mxu0
      %v1082 = vadd.f32 %v943, %v1081
      %v1083 = vpop.f32.mrf.mxu0
      %v1084 = vadd.f32 %v944, %v1083
      %1085 = vmatmul.bf16.gmra.mxu0 %v1008
      %v1086 = vpop.f32.mrf.mxu0
      %v1087 = vadd.f32 %v945, %v1086
      %v1088 = vpop.f32.mrf.mxu0
      %v1089 = vadd.f32 %v946, %v1088
      %1090 = vmatmul.bf16.gmra.mxu0 %v1011
      %v1091 = vpop.f32.mrf.mxu0
      %v1092 = vadd.f32 %v947, %v1091
      %v1093 = vpop.f32.mrf.mxu0
      %v1094 = vadd.f32 %v948, %v1093
      %1095 = vmatmul.bf16.gmra.mxu0 %v1014
      %v1096 = vpop.f32.mrf.mxu0
      %v1097 = vadd.f32 %v949, %v1096
      %v1098 = vpop.f32.mrf.mxu0
      %v1099 = vadd.f32 %v950, %v1098
      %1100 = vmatmul.bf16.gmra.mxu0 %v1017
      %v1101 = vpop.f32.mrf.mxu0
      %v1102 = vadd.f32 %v951, %v1101
      %v1103 = vpop.f32.mrf.mxu0
      %v1104 = vadd.f32 %v952, %v1103
      %1105 = vmatmul.bf16.gmra.mxu0 %v1020
      %v1106 = vpop.f32.mrf.mxu0
      %v1107 = vadd.f32 %v953, %v1106
      %v1108 = vpop.f32.mrf.mxu0
      %v1109 = vadd.f32 %v954, %v1108
      %1110 = vdwg.mxu0
      %v1111 = vld [vmem:[%s5] sm:$0x1]
      %v1113 = vperm.slane %v1111, 0
      %v1115 = vadd.f32 %v1032, %v1113
      %v1116 = vadd.f32 %v1034, %v1113
      %v1117 = vadd.f32 %v1037, %v1113
      %v1118 = vadd.f32 %v1039, %v1113
      %v1119 = vadd.f32 %v1042, %v1113
      %v1120 = vadd.f32 %v1044, %v1113
      %v1121 = vadd.f32 %v1047, %v1113
      %v1122 = vadd.f32 %v1049, %v1113
      %v1123 = vadd.f32 %v1052, %v1113
      %v1124 = vadd.f32 %v1054, %v1113
      %v1125 = vadd.f32 %v1057, %v1113
      %v1126 = vadd.f32 %v1059, %v1113
      %v1127 = vadd.f32 %v1062, %v1113
      %v1128 = vadd.f32 %v1064, %v1113
      %v1129 = vadd.f32 %v1067, %v1113
      %v1130 = vadd.f32 %v1069, %v1113
      %v1131 = vadd.f32 %v1072, %v1113
      %v1132 = vadd.f32 %v1074, %v1113
      %v1133 = vadd.f32 %v1077, %v1113
      %v1134 = vadd.f32 %v1079, %v1113
      %v1135 = vadd.f32 %v1082, %v1113
      %v1136 = vadd.f32 %v1084, %v1113
      %v1137 = vadd.f32 %v1087, %v1113
      %v1138 = vadd.f32 %v1089, %v1113
      %v1139 = vadd.f32 %v1092, %v1113
      %v1140 = vadd.f32 %v1094, %v1113
      %v1141 = vadd.f32 %v1097, %v1113
      %v1142 = vadd.f32 %v1099, %v1113
      %v1143 = vadd.f32 %v1102, %v1113
      %v1144 = vadd.f32 %v1104, %v1113
      %v1145 = vadd.f32 %v1107, %v1113
      %v1146 = vadd.f32 %v1109, %v1113
      %v1147 = vmax.f32 %v1115, 0.0
      %v1148 = vmax.f32 %v1116, 0.0
      %v1149 = vmax.f32 %v1117, 0.0
      %v1150 = vmax.f32 %v1118, 0.0
      %v1151 = vmax.f32 %v1119, 0.0
      %v1152 = vmax.f32 %v1120, 0.0
      %v1153 = vmax.f32 %v1121, 0.0
      %v1154 = vmax.f32 %v1122, 0.0
      %v1155 = vmax.f32 %v1123, 0.0
      %v1156 = vmax.f32 %v1124, 0.0
      %v1157 = vmax.f32 %v1125, 0.0
      %v1158 = vmax.f32 %v1126, 0.0
      %v1159 = vmax.f32 %v1127, 0.0
      %v1160 = vmax.f32 %v1128, 0.0
      %v1161 = vmax.f32 %v1129, 0.0
      %v1162 = vmax.f32 %v1130, 0.0
      %v1163 = vmax.f32 %v1131, 0.0
      %v1164 = vmax.f32 %v1132, 0.0
      %v1165 = vmax.f32 %v1133, 0.0
      %v1166 = vmax.f32 %v1134, 0.0
      %v1167 = vmax.f32 %v1135, 0.0
      %v1168 = vmax.f32 %v1136, 0.0
      %v1169 = vmax.f32 %v1137, 0.0
      %v1170 = vmax.f32 %v1138, 0.0
      %v1171 = vmax.f32 %v1139, 0.0
      %v1172 = vmax.f32 %v1140, 0.0
      %v1173 = vmax.f32 %v1141, 0.0
      %v1174 = vmax.f32 %v1142, 0.0
      %v1175 = vmax.f32 %v1143, 0.0
      %v1176 = vmax.f32 %v1144, 0.0
      %v1177 = vmax.f32 %v1145, 0.0
      %v1178 = vmax.f32 %v1146, 0.0
      %v1179 = vpack.c.bf16 %v1148, %v1147
      %v1180 = vpack.c.bf16 %v1150, %v1149
      %v1181 = vpack.c.bf16 %v1152, %v1151
      %v1182 = vpack.c.bf16 %v1154, %v1153
      %v1183 = vpack.c.bf16 %v1156, %v1155
      %v1184 = vpack.c.bf16 %v1158, %v1157
      %v1185 = vpack.c.bf16 %v1160, %v1159
      %v1186 = vpack.c.bf16 %v1162, %v1161
      %v1187 = vpack.c.bf16 %v1164, %v1163
      %v1188 = vpack.c.bf16 %v1166, %v1165
      %v1189 = vpack.c.bf16 %v1168, %v1167
      %v1190 = vpack.c.bf16 %v1170, %v1169
      %v1191 = vpack.c.bf16 %v1172, %v1171
      %v1192 = vpack.c.bf16 %v1174, %v1173
      %v1193 = vpack.c.bf16 %v1176, %v1175
      %v1194 = vpack.c.bf16 %v1178, %v1177
      %v1195 = vld [vmem:[%s6] sm:$0xf]
      %v1196 = vld [vmem:[%s6 + $0x4] sm:$0xf]
      %v1197 = vld [vmem:[%s6 + $0x8] sm:$0xf]
      %v1198 = vld [vmem:[%s6 + $0xc] sm:$0xf]
      %v1199 = vld [vmem:[%s6 + $0x10] sm:$0xf]
      %v1200 = vld [vmem:[%s6 + $0x14] sm:$0xf]
      %v1201 = vld [vmem:[%s6 + $0x18] sm:$0xf]
      %v1202 = vld [vmem:[%s6 + $0x1c] sm:$0xf]
      %v1203 = vld [vmem:[%s6 + $0x20] sm:$0xf]
      %v1204 = vld [vmem:[%s6 + $0x24] sm:$0xf]
      %v1205 = vld [vmem:[%s6 + $0x28] sm:$0xf]
      %v1206 = vld [vmem:[%s6 + $0x2c] sm:$0xf]
      %v1207 = vld [vmem:[%s7] sm:$0x1]
      %v1209 = vperm.slane %v1207, 0
      %v1223 = vunpack.c.l.b16 %v1195
      %v1224 = vunpack.c.l.b16 %v1196
      %v1225 = vunpack.c.l.b16 %v1197
      %v1226 = vunpack.c.l.b16 %v1198
      %v1227 = vunpack.c.l.b16 %v1199
      %v1228 = vunpack.c.l.b16 %v1200
      %v1229 = vunpack.c.l.b16 %v1201
      %v1230 = vunpack.c.l.b16 %v1202
      %v1231 = vunpack.c.l.b16 %v1203
      %v1232 = vunpack.c.l.b16 %v1204
      %v1233 = vunpack.c.l.b16 %v1205
      %v1234 = vunpack.c.l.b16 %v1206
      %v1235 = vpack.c.b16 %v1224, %v1223
      %v1236 = vpack.c.b16 %v1226, %v1225
      %v1237 = vpack.c.b16 %v1228, %v1227
      %v1238 = vpack.c.b16 %v1230, %v1229
      %v1239 = vpack.c.b16 %v1232, %v1231
      %v1240 = vpack.c.b16 %v1234, %v1233
      %vm1247 = vcmask 785408
      %v1249 = vsel %vm1247, %v1179, 0
      %v1252 = vsel %vm1247, %v1180, 0
      %v1255 = vsel %vm1247, %v1181, 0
      %v1258 = vsel %vm1247, %v1182, 0
      %v1261 = vsel %vm1247, %v1183, 0
      %v1264 = vsel %vm1247, %v1184, 0
      %v1267 = vsel %vm1247, %v1185, 0
      %v1270 = vsel %vm1247, %v1186, 0
      %v1273 = vsel %vm1247, %v1187, 0
      %v1276 = vsel %vm1247, %v1188, 0
      %v1279 = vsel %vm1247, %v1189, 0
      %v1282 = vsel %vm1247, %v1190, 0
      %v1285 = vsel %vm1247, %v1191, 0
      %v1288 = vsel %vm1247, %v1192, 0
      %v1291 = vsel %vm1247, %v1193, 0
      %v1294 = vsel %vm1247, %v1194, 0
      %1296 = vmatpush.bf16.msra.mxu0 0
      %1297 = vmatpush.bf16.msra.mxu0 0
      %1298 = vmatpush.bf16.msra.mxu0 %v1240
      %1299 = vmatpush.bf16.msra.mxu0 %v1239
      %1300 = vmatpush.bf16.msra.mxu0 %v1238
      %1301 = vmatpush.bf16.msra.mxu0 %v1237
      %1302 = vmatpush.bf16.msra.mxu0 %v1236
      %1303 = vmatpush.bf16.msra.mxu0 %v1235
      %1304 = vmatmul.bf16.gmra.mxu0 %v1249
      %v1305 = vpop.f32.mrf.mxu0
      %v1306 = vadd.f32 %v1209, %v1305
      %v1307 = vpop.f32.mrf.mxu0
      %v1308 = vadd.f32 %v1209, %v1307
      %1309 = vmatmul.bf16.gmra.mxu0 %v1252
      %v1310 = vpop.f32.mrf.mxu0
      %v1311 = vadd.f32 %v1209, %v1310
      %v1312 = vpop.f32.mrf.mxu0
      %v1313 = vadd.f32 %v1209, %v1312
      %1314 = vmatmul.bf16.gmra.mxu0 %v1255
      %v1315 = vpop.f32.mrf.mxu0
      %v1316 = vadd.f32 %v1209, %v1315
      %v1317 = vpop.f32.mrf.mxu0
      %v1318 = vadd.f32 %v1209, %v1317
      %1319 = vmatmul.bf16.gmra.mxu0 %v1258
      %v1320 = vpop.f32.mrf.mxu0
      %v1321 = vadd.f32 %v1209, %v1320
      %v1322 = vpop.f32.mrf.mxu0
      %v1323 = vadd.f32 %v1209, %v1322
      %1324 = vmatmul.bf16.gmra.mxu0 %v1261
      %v1325 = vpop.f32.mrf.mxu0
      %v1326 = vadd.f32 %v1209, %v1325
      %v1327 = vpop.f32.mrf.mxu0
      %v1328 = vadd.f32 %v1209, %v1327
      %1329 = vmatmul.bf16.gmra.mxu0 %v1264
      %v1330 = vpop.f32.mrf.mxu0
      %v1331 = vadd.f32 %v1209, %v1330
      %v1332 = vpop.f32.mrf.mxu0
      %v1333 = vadd.f32 %v1209, %v1332
      %1334 = vmatmul.bf16.gmra.mxu0 %v1267
      %v1335 = vpop.f32.mrf.mxu0
      %v1336 = vadd.f32 %v1209, %v1335
      %v1337 = vpop.f32.mrf.mxu0
      %v1338 = vadd.f32 %v1209, %v1337
      %1339 = vmatmul.bf16.gmra.mxu0 %v1270
      %v1340 = vpop.f32.mrf.mxu0
      %v1341 = vadd.f32 %v1209, %v1340
      %v1342 = vpop.f32.mrf.mxu0
      %v1343 = vadd.f32 %v1209, %v1342
      %1344 = vmatmul.bf16.gmra.mxu0 %v1273
      %v1345 = vpop.f32.mrf.mxu0
      %v1346 = vadd.f32 %v1209, %v1345
      %v1347 = vpop.f32.mrf.mxu0
      %v1348 = vadd.f32 %v1209, %v1347
      %1349 = vmatmul.bf16.gmra.mxu0 %v1276
      %v1350 = vpop.f32.mrf.mxu0
      %v1351 = vadd.f32 %v1209, %v1350
      %v1352 = vpop.f32.mrf.mxu0
      %v1353 = vadd.f32 %v1209, %v1352
      %1354 = vmatmul.bf16.gmra.mxu0 %v1279
      %v1355 = vpop.f32.mrf.mxu0
      %v1356 = vadd.f32 %v1209, %v1355
      %v1357 = vpop.f32.mrf.mxu0
      %v1358 = vadd.f32 %v1209, %v1357
      %1359 = vmatmul.bf16.gmra.mxu0 %v1282
      %v1360 = vpop.f32.mrf.mxu0
      %v1361 = vadd.f32 %v1209, %v1360
      %v1362 = vpop.f32.mrf.mxu0
      %v1363 = vadd.f32 %v1209, %v1362
      %1364 = vmatmul.bf16.gmra.mxu0 %v1285
      %v1365 = vpop.f32.mrf.mxu0
      %v1366 = vadd.f32 %v1209, %v1365
      %v1367 = vpop.f32.mrf.mxu0
      %v1368 = vadd.f32 %v1209, %v1367
      %1369 = vmatmul.bf16.gmra.mxu0 %v1288
      %v1370 = vpop.f32.mrf.mxu0
      %v1371 = vadd.f32 %v1209, %v1370
      %v1372 = vpop.f32.mrf.mxu0
      %v1373 = vadd.f32 %v1209, %v1372
      %1374 = vmatmul.bf16.gmra.mxu0 %v1291
      %v1375 = vpop.f32.mrf.mxu0
      %v1376 = vadd.f32 %v1209, %v1375
      %v1377 = vpop.f32.mrf.mxu0
      %v1378 = vadd.f32 %v1209, %v1377
      %1379 = vmatmul.bf16.gmra.mxu0 %v1294
      %v1380 = vpop.f32.mrf.mxu0
      %v1381 = vadd.f32 %v1209, %v1380
      %v1382 = vpop.f32.mrf.mxu0
      %v1383 = vadd.f32 %v1209, %v1382
      %1384 = vdwg.mxu0
      %v1385 = vmax.f32 %v1306, 0.0
      %v1386 = vmax.f32 %v1308, 0.0
      %v1387 = vmax.f32 %v1311, 0.0
      %v1388 = vmax.f32 %v1313, 0.0
      %v1389 = vmax.f32 %v1316, 0.0
      %v1390 = vmax.f32 %v1318, 0.0
      %v1391 = vmax.f32 %v1321, 0.0
      %v1392 = vmax.f32 %v1323, 0.0
      %v1393 = vmax.f32 %v1326, 0.0
      %v1394 = vmax.f32 %v1328, 0.0
      %v1395 = vmax.f32 %v1331, 0.0
      %v1396 = vmax.f32 %v1333, 0.0
      %v1397 = vmax.f32 %v1336, 0.0
      %v1398 = vmax.f32 %v1338, 0.0
      %v1399 = vmax.f32 %v1341, 0.0
      %v1400 = vmax.f32 %v1343, 0.0
      %v1401 = vmax.f32 %v1346, 0.0
      %v1402 = vmax.f32 %v1348, 0.0
      %v1403 = vmax.f32 %v1351, 0.0
      %v1404 = vmax.f32 %v1353, 0.0
      %v1405 = vmax.f32 %v1356, 0.0
      %v1406 = vmax.f32 %v1358, 0.0
      %v1407 = vmax.f32 %v1361, 0.0
      %v1408 = vmax.f32 %v1363, 0.0
      %v1409 = vmax.f32 %v1366, 0.0
      %v1410 = vmax.f32 %v1368, 0.0
      %v1411 = vmax.f32 %v1371, 0.0
      %v1412 = vmax.f32 %v1373, 0.0
      %v1413 = vmax.f32 %v1376, 0.0
      %v1414 = vmax.f32 %v1378, 0.0
      %v1415 = vmax.f32 %v1381, 0.0
      %v1416 = vmax.f32 %v1383, 0.0
      %v1417 = vpack.c.bf16 %v1385, %v1385
      %v1418 = vpack.c.bf16 %v1386, %v1386
      %v1419 = vpack.c.bf16 %v1387, %v1387
      %v1420 = vpack.c.bf16 %v1388, %v1388
      %v1421 = vpack.c.bf16 %v1389, %v1389
      %v1422 = vpack.c.bf16 %v1390, %v1390
      %v1423 = vpack.c.bf16 %v1391, %v1391
      %v1424 = vpack.c.bf16 %v1392, %v1392
      %v1425 = vpack.c.bf16 %v1393, %v1393
      %v1426 = vpack.c.bf16 %v1394, %v1394
      %v1427 = vpack.c.bf16 %v1395, %v1395
      %v1428 = vpack.c.bf16 %v1396, %v1396
      %v1429 = vpack.c.bf16 %v1397, %v1397
      %v1430 = vpack.c.bf16 %v1398, %v1398
      %v1431 = vpack.c.bf16 %v1399, %v1399
      %v1432 = vpack.c.bf16 %v1400, %v1400
      %v1433 = vpack.c.bf16 %v1401, %v1401
      %v1434 = vpack.c.bf16 %v1402, %v1402
      %v1435 = vpack.c.bf16 %v1403, %v1403
      %v1436 = vpack.c.bf16 %v1404, %v1404
      %v1437 = vpack.c.bf16 %v1405, %v1405
      %v1438 = vpack.c.bf16 %v1406, %v1406
      %v1439 = vpack.c.bf16 %v1407, %v1407
      %v1440 = vpack.c.bf16 %v1408, %v1408
      %v1441 = vpack.c.bf16 %v1409, %v1409
      %v1442 = vpack.c.bf16 %v1410, %v1410
      %v1443 = vpack.c.bf16 %v1411, %v1411
      %v1444 = vpack.c.bf16 %v1412, %v1412
      %v1445 = vpack.c.bf16 %v1413, %v1413
      %v1446 = vpack.c.bf16 %v1414, %v1414
      %v1447 = vpack.c.bf16 %v1415, %v1415
      %v1448 = vpack.c.bf16 %v1416, %v1416
      %1449 = vst [vmem:[%s332] sm:$0xf] %v1417
      %1450 = vst [vmem:[%s332 + $0x4] sm:$0xf] %v1418
      %1451 = vst [vmem:[%s332 + $0x8] sm:$0xf] %v1419
      %1452 = vst [vmem:[%s332 + $0xc] sm:$0xf] %v1420
      %1453 = vst [vmem:[%s332 + $0x10] sm:$0xf] %v1421
      %1454 = vst [vmem:[%s332 + $0x14] sm:$0xf] %v1422
      %1455 = vst [vmem:[%s332 + $0x18] sm:$0xf] %v1423
      %1456 = vst [vmem:[%s332 + $0x1c] sm:$0xf] %v1424
      %1457 = vst [vmem:[%s332 + $0x20] sm:$0xf] %v1425
      %1458 = vst [vmem:[%s332 + $0x24] sm:$0xf] %v1426
      %1459 = vst [vmem:[%s332 + $0x28] sm:$0xf] %v1427
      %1460 = vst [vmem:[%s332 + $0x2c] sm:$0xf] %v1428
      %1461 = vst [vmem:[%s332 + $0x30] sm:$0xf] %v1429
      %1462 = vst [vmem:[%s332 + $0x34] sm:$0xf] %v1430
      %1463 = vst [vmem:[%s332 + $0x38] sm:$0xf] %v1431
      %1464 = vst [vmem:[%s332 + $0x3c] sm:$0xf] %v1432
      %1465 = vst [vmem:[%s332 + $0x40] sm:$0xf] %v1433
      %1466 = vst [vmem:[%s332 + $0x44] sm:$0xf] %v1434
      %1467 = vst [vmem:[%s332 + $0x48] sm:$0xf] %v1435
      %1468 = vst [vmem:[%s332 + $0x4c] sm:$0xf] %v1436
      %1469 = vst [vmem:[%s332 + $0x50] sm:$0xf] %v1437
      %1470 = vst [vmem:[%s332 + $0x54] sm:$0xf] %v1438
      %1471 = vst [vmem:[%s332 + $0x58] sm:$0xf] %v1439
      %1472 = vst [vmem:[%s332 + $0x5c] sm:$0xf] %v1440
      %1473 = vst [vmem:[%s332 + $0x60] sm:$0xf] %v1441
      %1474 = vst [vmem:[%s332 + $0x64] sm:$0xf] %v1442
      %1475 = vst [vmem:[%s332 + $0x68] sm:$0xf] %v1443
      %1476 = vst [vmem:[%s332 + $0x6c] sm:$0xf] %v1444
      %1477 = vst [vmem:[%s332 + $0x70] sm:$0xf] %v1445
      %1478 = vst [vmem:[%s332 + $0x74] sm:$0xf] %v1446
      %1479 = vst [vmem:[%s332 + $0x78] sm:$0xf] %v1447
      %1480 = vst [vmem:[%s332 + $0x7c] sm:$0xf] %v1448
      %s1481 = smul.u32 32, %s19
      %p1482 = scmp.lt.s32.totalorder %s1481, 63
      %s1483 = scalar_select %p1482, %s1481, 63
      %s1484 = smul.addr %s1483, 4
      %s1485 = scalar_lea.vmem %s8, %s1484
      // Predicated region
      $region53: #{final_cls_forward.1} parent=51 // pred_check
        %p1486 = pneg %p215
      $region54: #{final_cls_forward.1} parent=51 // pred_check_branch
        %1488 = sbr.rel (%p1486) target = $region56
      $region55: #{final_cls_forward.1} parent=51 // pred_region
        %s1489 = smul.u32 32, %s19
      $region56: #{final_cls_forward.1} parent=51 // pred_fallthru
        _
    $region52: #{final_cls_forward.1} parent=5 // pred_fallthru
      _
    %p1490 = scmp.le.s32.totalorder 2, %s14
    // Predicated region
    $region57: #{final_cls_forward.1} parent=5 // pred_check
      %p1491 = pneg %p1490
    $region58: #{final_cls_forward.1} parent=5 // pred_check_branch
      %1493 = sbr.rel (%p1491) target = $region60
    $region59: #{final_cls_forward.1} parent=5 // pred_region
      %s1494 = ssub.s32 %s14, 2
      // Predicated region
      $region61: #{final_cls_forward.1} parent=59 // pred_check
        %p1495 = pneg %p221
      $region62: #{final_cls_forward.1} parent=59 // pred_check_branch
        %1497 = sbr.rel (%p1495) target = $region64
      $region63: #{final_cls_forward.1} parent=59 // pred_region
        %s1498 = smul.u32 32, %s20
        %p1499 = scmp.lt.s32.totalorder %s1498, 63
        %s1500 = scalar_select %p1499, %s1498, 63
        %s1501 = smul.addr %s1500, 4
        %s1502 = scalar_lea.vmem %s8, %s1501
      $region64: #{final_cls_forward.1} parent=59 // pred_fallthru
        _
    $region60: #{final_cls_forward.1} parent=5 // pred_fallthru
      _
  $region6: #{final_cls_forward.1} parent=0 // loop_footer
    %s18 = sadd.s32 1, %s14
  $region7: #{final_cls_forward.1} parent=0 // loop_footer_branch
    %13 = sbr.rel target = $region3
  $region8: #{final_cls_forward.1} parent=0 // loop_exit
    _

</llo_original>
